<compile_context>
chip_gen: v7x
topology: tpu7x:2x2x1
jax: 0.10.0
libtpu: 0.0.40
codegen_flags: <defaults>
</compile_context>

<pallas_src>
import functools

import jax
import jax.numpy as jnp
from jax.experimental import pallas as pl
from jax.experimental.pallas import tpu as pltpu

EPS = 1e-5  # PyTorch BatchNorm2d default eps


def _round_up(x, m):
    return (x + m - 1) // m * m


def _pack_w3x3(w_hwio, cin, cout, cpad):
    """(3,3,cin,cout) HWIO -> bf16 (cout, 9*cpad); col t*cpad+ci holds w[t//3, t%3, ci, :].

    Channel-padding columns are zero, matching the zeroed im2col rows."""
    w = w_hwio.reshape(9, cin, cout)
    w = jnp.pad(w, ((0, 0), (0, cpad - cin), (0, 0)))
    return jnp.transpose(w.reshape(9 * cpad, cout)).astype(jnp.bfloat16)


def _build_tap_masks(B, H, W):
    """(9, B*H*W) {0,1} bf16 validity masks for the 9 taps over the flat lane axis.

    Computed once per spatial shape on the host (cached in a real model); replaces the
    in-kernel integer div/mod mask construction.  Any lane where a circular shift of the
    flat (batch,row,col) axis would wrap across an image / batch / array boundary is
    exactly a masked lane, so rolling the flat axis inside the kernel is safe."""
    HW = H * W
    pos = jnp.arange(B * HW, dtype=jnp.int32)
    row = (pos % HW) // W
    col = pos % W
    rows = []
    for di in (-1, 0, 1):
        for dj in (-1, 0, 1):
            m = (row + di >= 0) & (row + di < H) & (col + dj >= 0) & (col + dj < W)
            rows.append(m)
    return jnp.stack(rows).astype(jnp.bfloat16)


def doubleconv_kernel(x_ref, mask_ref, w1_ref, g1_ref, b1_ref,
                      w2_ref, g2_ref, b2_ref,
                      w3_ref, g3_ref, b3_ref,
                      out_ref, col_ref,
                      *, B, H, W, Cin, Cout, cpad):
    HW = H * W
    L = B * HW
    taps = [(di, dj) for di in (-1, 0, 1) for dj in (-1, 0, 1)]

    # hoist the 9 (1, L) mask rows once; shared by both 3x3 convs.
    mask_rows = [mask_ref[t:t + 1, :] for t in range(9)]

    def fill_col(xb, cin, stale):
        # im2col rows [t*cpad + c] = boundary-masked circular shift of channel c by tap t.
        # `stale` = rows per tap block that may hold stale data; rows >= `stale` are
        # known-zero already, so channel-padding rows are written at most once.
        for t, (di, dj) in enumerate(taps):
            d = di * W + dj
            tap = xb if d == 0 else jnp.roll(xb, -d, axis=1) * mask_rows[t]
            col_ref[t * cpad:t * cpad + cin, :] = tap
            if stale > cin:
                col_ref[t * cpad + cin:t * cpad + stale, :] = jnp.zeros(
                    (stale - cin, L), jnp.bfloat16)

    def conv3x3(xb, w_ref, cin, stale):
        fill_col(xb, cin, stale)
        # one MXU pass: (Cout, 9*cpad) @ (9*cpad, L), bf16 operands, f32 accumulation.
        return jnp.dot(w_ref[...], col_ref[...], preferred_element_type=jnp.float32)

    def bn(y, g_ref, b_ref, relu):
        # one-pass train-mode BatchNorm in f32, folded scale/shift (+ optional ReLU).
        inv_n = 1.0 / L
        mean = jnp.sum(y, axis=1, keepdims=True) * inv_n
        var = jnp.sum(y * y, axis=1, keepdims=True) * inv_n - mean * mean
        var = jnp.maximum(var, 0.0)          # cancellation guard for E[x^2] - mean^2
        scale = g_ref[...] * jax.lax.rsqrt(var + EPS)
        shift = b_ref[...] - mean * scale
        out = y * scale + shift
        return jnp.maximum(out, 0.0) if relu else out

    xb = x_ref[...]                                                    # (Cin, L) bf16

    # --- ConvBNReLU #1 (zeroes the channel-padding rows of col_ref, once) ---
    y1 = bn(conv3x3(xb, w1_ref, Cin, stale=cpad), g1_ref, b1_ref, relu=True)
    # --- ConvBNReLU #2, no activation (padding rows of col_ref are still zero) ---
    h = bn(conv3x3(y1.astype(jnp.bfloat16), w2_ref, Cout, stale=Cin),
           g2_ref, b2_ref, relu=False)                                 # (Cout, L) f32
    # --- 1x1 conv + BN + residual + ReLU (conv bias dropped: cancelled by train BN) ---
    z = bn(jnp.dot(w3_ref[...], h.astype(jnp.bfloat16),
                   preferred_element_type=jnp.float32),
           g3_ref, b3_ref, relu=False)
    out_ref[...] = jnp.maximum(h + z, 0.0)        # (Cout, L): lane-dense, unmasked vst


def double_conv(x_nchw, params):
    B, Cin, H, W = x_nchw.shape
    Cout = params["w1"].shape[-1]
    HW, L = H * W, B * H * W
    assert L % 128 == 0, "flattened batch*spatial axis must stay lane-aligned"

    # shared channel pad; multiple of 16 so the bf16 im2col K dim is sublane-tiled.
    cpad = _round_up(max(Cin, Cout), 16)

    # one-time packing / layout work (cached in a real model)
    w1_mat = _pack_w3x3(params["w1"], Cin, Cout, cpad)            # (Cout, 9*cpad) bf16
    w2_mat = _pack_w3x3(params["w2"], Cout, Cout, cpad)           # (Cout, 9*cpad) bf16
    w3_mat = jnp.transpose(params["w3"]).astype(jnp.bfloat16)     # (Cout, Cout)  bf16
    masks = _build_tap_masks(B, H, W)                             # (9, L)        bf16

    # channel-major slab (Cin, B*H*W) in bf16: one XLA transpose + cast in the wrapper,
    # no in-kernel concat, input DMA volume halved.
    x_cl = jnp.transpose(x_nchw.reshape(B, Cin, HW), (1, 0, 2)).reshape(Cin, L)
    x_cl = x_cl.astype(jnp.bfloat16)

    kernel = functools.partial(doubleconv_kernel, B=B, H=H, W=W,
                               Cin=Cin, Cout=Cout, cpad=cpad)
    vmem = pl.BlockSpec(memory_space=pltpu.MemorySpace.VMEM)

    out = pl.pallas_call(
        kernel,
        out_shape=jax.ShapeDtypeStruct((Cout, L), jnp.float32),
        in_specs=[vmem] * 11,
        out_specs=vmem,
        scratch_shapes=[pltpu.VMEM((9 * cpad, L), jnp.bfloat16)],
        compiler_params=pltpu.CompilerParams(vmem_limit_bytes=32 * 1024 * 1024),
    )(x_cl, masks,
      w1_mat, params["g1"].reshape(Cout, 1), params["b1"].reshape(Cout, 1),
      w2_mat, params["g2"].reshape(Cout, 1), params["b2"].reshape(Cout, 1),
      w3_mat, params["g3"].reshape(Cout, 1), params["b3"].reshape(Cout, 1))

    # (Cout, B*H*W) -> NCHW (one XLA transpose back)
    return jnp.transpose(out.reshape(Cout, B, H, W), (1, 0, 2, 3))


# ------------------------- pure-JAX reference (for verification) -------------------------
def ref_forward(x_nchw, params, matmul_dtype=jnp.float32):
    """Reference DoubleConv. matmul_dtype=bf16 mirrors the kernel's MXU operand casts
    (with f32 accumulation) so the comparison isolates implementation differences."""
    x = jnp.transpose(x_nchw, (0, 2, 3, 1))

    def conv3(a, w):  # w: (3,3,Cin,Cout) HWIO
        return jax.lax.conv_general_dilated(
            a.astype(matmul_dtype), w.astype(matmul_dtype),
            window_strides=(1, 1), padding=((1, 1), (1, 1)),
            dimension_numbers=("NHWC", "HWIO", "NHWC"),
            preferred_element_type=jnp.float32)

    def bn(a, g, b):
        mean = a.mean(axis=(0, 1, 2), keepdims=True)
        var = ((a - mean) ** 2).mean(axis=(0, 1, 2), keepdims=True)
        return (a - mean) * jax.lax.rsqrt(var + EPS) * g + b

    y = jax.nn.relu(bn(conv3(x, params["w1"]), params["g1"], params["b1"]))
    h = bn(conv3(y, params["w2"]), params["g2"], params["b2"])
    z = jnp.einsum("nhwc,cd->nhwd", h.astype(matmul_dtype),
                   params["w3"].astype(matmul_dtype),
                   preferred_element_type=jnp.float32) + params["bias3"]
    z = bn(z, params["g3"], params["b3"])
    out = jax.nn.relu(h + z)
    return jnp.transpose(out, (0, 3, 1, 2))


if __name__ == "__main__":
    B, Cin, Cout, H, W = 2, 4, 8, 16, 16
    key = jax.random.PRNGKey(0)
    ks = jax.random.split(key, 12)

    x = jax.random.normal(ks[0], (B, Cin, H, W), jnp.float32)
    params = {
        # 3x3 conv weights in HWIO (equivalent to PyTorch (Cout,Cin,3,3) permuted)
        "w1": 0.1 * jax.random.normal(ks[1], (3, 3, Cin, Cout), jnp.float32),
        "g1": 1.0 + 0.1 * jax.random.normal(ks[2], (1, Cout), jnp.float32),
        "b1": 0.1 * jax.random.normal(ks[3], (1, Cout), jnp.float32),
        "w2": 0.1 * jax.random.normal(ks[4], (3, 3, Cout, Cout), jnp.float32),
        "g2": 1.0 + 0.1 * jax.random.normal(ks[5], (1, Cout), jnp.float32),
        "b2": 0.1 * jax.random.normal(ks[6], (1, Cout), jnp.float32),
        # 1x1 conv: (Cin=Cout, Cout) matmul form + bias (bias only used by the reference;
        # the kernel drops it since train-mode BN cancels it exactly)
        "w3": 0.1 * jax.random.normal(ks[7], (Cout, Cout), jnp.float32),
        "bias3": 0.1 * jax.random.normal(ks[8], (1, Cout), jnp.float32),
        "g3": 1.0 + 0.1 * jax.random.normal(ks[9], (1, Cout), jnp.float32),
        "b3": 0.1 * jax.random.normal(ks[10], (1, Cout), jnp.float32),
    }

    out = jax.block_until_ready(double_conv(x, params))
    assert out.shape == (B, Cout, H, W), out.shape

    # tight check vs. a precision-matched reference (same bf16 MXU operand casts)
    ref_bf16 = jax.block_until_ready(ref_forward(x, params, matmul_dtype=jnp.bfloat16))
    err = float(jnp.max(jnp.abs(out - ref_bf16)))
    assert jnp.allclose(out, ref_bf16, atol=1e-2, rtol=1e-2), err

    # loose semantic check vs. the full-f32 reference (bf16 operand quantization only)
    ref_f32 = jax.block_until_ready(ref_forward(x, params, matmul_dtype=jnp.float32))
    rel = float(jnp.linalg.norm(out - ref_f32) / jnp.linalg.norm(ref_f32))
    assert rel < 5e-2, rel

    print("KERNEL_OK")
</pallas_src>

<mosaic_0001>
module attributes {stable_mosaic.version = 11 : i64} {
  func.func @doubleconv_kernel(%arg0: memref<4x512xbf16, #tpu.memory_space<vmem>>, %arg1: memref<9x512xbf16, #tpu.memory_space<vmem>>, %arg2: memref<8x144xbf16, #tpu.memory_space<vmem>>, %arg3: memref<8x1xf32, #tpu.memory_space<vmem>>, %arg4: memref<8x1xf32, #tpu.memory_space<vmem>>, %arg5: memref<8x144xbf16, #tpu.memory_space<vmem>>, %arg6: memref<8x1xf32, #tpu.memory_space<vmem>>, %arg7: memref<8x1xf32, #tpu.memory_space<vmem>>, %arg8: memref<8x8xbf16, #tpu.memory_space<vmem>>, %arg9: memref<8x1xf32, #tpu.memory_space<vmem>>, %arg10: memref<8x1xf32, #tpu.memory_space<vmem>>, %arg11: memref<8x512xf32, #tpu.memory_space<vmem>>, %arg12: memref<144x512xbf16, #tpu.memory_space<vmem>>) attributes {dimension_semantics = [], scalar_prefetch = 0 : i64, scratch_operands = 1 : i64, tpu.core_type = #tpu.core_type<tc>} {
    %c0 = arith.constant 0 : index
    %c0_0 = arith.constant 0 : index
    %0 = vector.load %arg1[%c0, %c0_0] : memref<9x512xbf16, #tpu.memory_space<vmem>>, vector<1x512xbf16>
    %c1 = arith.constant 1 : index
    %c0_1 = arith.constant 0 : index
    %1 = vector.load %arg1[%c1, %c0_1] : memref<9x512xbf16, #tpu.memory_space<vmem>>, vector<1x512xbf16>
    %c2 = arith.constant 2 : index
    %c0_2 = arith.constant 0 : index
    %2 = vector.load %arg1[%c2, %c0_2] : memref<9x512xbf16, #tpu.memory_space<vmem>>, vector<1x512xbf16>
    %c3 = arith.constant 3 : index
    %c0_3 = arith.constant 0 : index
    %3 = vector.load %arg1[%c3, %c0_3] : memref<9x512xbf16, #tpu.memory_space<vmem>>, vector<1x512xbf16>
    %c5 = arith.constant 5 : index
    %c0_4 = arith.constant 0 : index
    %4 = vector.load %arg1[%c5, %c0_4] : memref<9x512xbf16, #tpu.memory_space<vmem>>, vector<1x512xbf16>
    %c6 = arith.constant 6 : index
    %c0_5 = arith.constant 0 : index
    %5 = vector.load %arg1[%c6, %c0_5] : memref<9x512xbf16, #tpu.memory_space<vmem>>, vector<1x512xbf16>
    %c7 = arith.constant 7 : index
    %c0_6 = arith.constant 0 : index
    %6 = vector.load %arg1[%c7, %c0_6] : memref<9x512xbf16, #tpu.memory_space<vmem>>, vector<1x512xbf16>
    %c8 = arith.constant 8 : index
    %c0_7 = arith.constant 0 : index
    %7 = vector.load %arg1[%c8, %c0_7] : memref<9x512xbf16, #tpu.memory_space<vmem>>, vector<1x512xbf16>
    %c0_8 = arith.constant 0 : index
    %c0_9 = arith.constant 0 : index
    %8 = vector.load %arg0[%c0_8, %c0_9] : memref<4x512xbf16, #tpu.memory_space<vmem>>, vector<4x512xbf16>
    %9 = vector.extract_strided_slice %8 {offsets = [0, 495], sizes = [4, 17], strides = [1, 1]} : vector<4x512xbf16> to vector<4x17xbf16>
    %10 = vector.extract_strided_slice %8 {offsets = [0, 0], sizes = [4, 495], strides = [1, 1]} : vector<4x512xbf16> to vector<4x495xbf16>
    %11 = tpu.concatenate %9, %10 in 1 : vector<4x17xbf16>, vector<4x495xbf16> -> vector<4x512xbf16>
    %12 = vector.broadcast %0 : vector<1x512xbf16> to vector<4x512xbf16>
    %13 = arith.mulf %11, %12 : vector<4x512xbf16>
    %c0_10 = arith.constant 0 : index
    %c0_11 = arith.constant 0 : index
    %14 = vector.load %arg12[%c0_10, %c0_11] : memref<144x512xbf16, #tpu.memory_space<vmem>>, vector<4x512xbf16>
    tpu.vector_store %arg12[%c0_10, %c0_11], %13 {strides = array<i32>} : memref<144x512xbf16, #tpu.memory_space<vmem>>, vector<4x512xbf16>,
    %cst = arith.constant 0.000000e+00 : bf16
    %15 = vector.broadcast %cst : bf16 to vector<12x512xbf16>
    %c4 = arith.constant 4 : index
    %c0_12 = arith.constant 0 : index
    %16 = vector.load %arg12[%c4, %c0_12] : memref<144x512xbf16, #tpu.memory_space<vmem>>, vector<12x512xbf16>
    tpu.vector_store %arg12[%c4, %c0_12], %15 {strides = array<i32>} : memref<144x512xbf16, #tpu.memory_space<vmem>>, vector<12x512xbf16>,
    %17 = vector.extract_strided_slice %8 {offsets = [0, 496], sizes = [4, 16], strides = [1, 1]} : vector<4x512xbf16> to vector<4x16xbf16>
    %18 = vector.extract_strided_slice %8 {offsets = [0, 0], sizes = [4, 496], strides = [1, 1]} : vector<4x512xbf16> to vector<4x496xbf16>
    %19 = tpu.concatenate %17, %18 in 1 : vector<4x16xbf16>, vector<4x496xbf16> -> vector<4x512xbf16>
    %20 = vector.broadcast %1 : vector<1x512xbf16> to vector<4x512xbf16>
    %21 = arith.mulf %19, %20 : vector<4x512xbf16>
    %c16 = arith.constant 16 : index
    %c0_13 = arith.constant 0 : index
    %22 = vector.load %arg12[%c16, %c0_13] : memref<144x512xbf16, #tpu.memory_space<vmem>>, vector<4x512xbf16>
    tpu.vector_store %arg12[%c16, %c0_13], %21 {strides = array<i32>} : memref<144x512xbf16, #tpu.memory_space<vmem>>, vector<4x512xbf16>,
    %cst_14 = arith.constant 0.000000e+00 : bf16
    %23 = vector.broadcast %cst_14 : bf16 to vector<12x512xbf16>
    %c20 = arith.constant 20 : index
    %c0_15 = arith.constant 0 : index
    %24 = vector.load %arg12[%c20, %c0_15] : memref<144x512xbf16, #tpu.memory_space<vmem>>, vector<12x512xbf16>
    tpu.vector_store %arg12[%c20, %c0_15], %23 {strides = array<i32>} : memref<144x512xbf16, #tpu.memory_space<vmem>>, vector<12x512xbf16>,
    %25 = vector.extract_strided_slice %8 {offsets = [0, 497], sizes = [4, 15], strides = [1, 1]} : vector<4x512xbf16> to vector<4x15xbf16>
    %26 = vector.extract_strided_slice %8 {offsets = [0, 0], sizes = [4, 497], strides = [1, 1]} : vector<4x512xbf16> to vector<4x497xbf16>
    %27 = tpu.concatenate %25, %26 in 1 : vector<4x15xbf16>, vector<4x497xbf16> -> vector<4x512xbf16>
    %28 = vector.broadcast %2 : vector<1x512xbf16> to vector<4x512xbf16>
    %29 = arith.mulf %27, %28 : vector<4x512xbf16>
    %c32 = arith.constant 32 : index
    %c0_16 = arith.constant 0 : index
    %30 = vector.load %arg12[%c32, %c0_16] : memref<144x512xbf16, #tpu.memory_space<vmem>>, vector<4x512xbf16>
    tpu.vector_store %arg12[%c32, %c0_16], %29 {strides = array<i32>} : memref<144x512xbf16, #tpu.memory_space<vmem>>, vector<4x512xbf16>,
    %cst_17 = arith.constant 0.000000e+00 : bf16
    %31 = vector.broadcast %cst_17 : bf16 to vector<12x512xbf16>
    %c36 = arith.constant 36 : index
    %c0_18 = arith.constant 0 : index
    %32 = vector.load %arg12[%c36, %c0_18] : memref<144x512xbf16, #tpu.memory_space<vmem>>, vector<12x512xbf16>
    tpu.vector_store %arg12[%c36, %c0_18], %31 {strides = array<i32>} : memref<144x512xbf16, #tpu.memory_space<vmem>>, vector<12x512xbf16>,
    %33 = vector.extract_strided_slice %8 {offsets = [0, 511], sizes = [4, 1], strides = [1, 1]} : vector<4x512xbf16> to vector<4x1xbf16>
    %34 = vector.extract_strided_slice %8 {offsets = [0, 0], sizes = [4, 511], strides = [1, 1]} : vector<4x512xbf16> to vector<4x511xbf16>
    %35 = tpu.concatenate %33, %34 in 1 : vector<4x1xbf16>, vector<4x511xbf16> -> vector<4x512xbf16>
    %36 = vector.broadcast %3 : vector<1x512xbf16> to vector<4x512xbf16>
    %37 = arith.mulf %35, %36 : vector<4x512xbf16>
    %c48 = arith.constant 48 : index
    %c0_19 = arith.constant 0 : index
    %38 = vector.load %arg12[%c48, %c0_19] : memref<144x512xbf16, #tpu.memory_space<vmem>>, vector<4x512xbf16>
    tpu.vector_store %arg12[%c48, %c0_19], %37 {strides = array<i32>} : memref<144x512xbf16, #tpu.memory_space<vmem>>, vector<4x512xbf16>,
    %cst_20 = arith.constant 0.000000e+00 : bf16
    %39 = vector.broadcast %cst_20 : bf16 to vector<12x512xbf16>
    %c52 = arith.constant 52 : index
    %c0_21 = arith.constant 0 : index
    %40 = vector.load %arg12[%c52, %c0_21] : memref<144x512xbf16, #tpu.memory_space<vmem>>, vector<12x512xbf16>
    tpu.vector_store %arg12[%c52, %c0_21], %39 {strides = array<i32>} : memref<144x512xbf16, #tpu.memory_space<vmem>>, vector<12x512xbf16>,
    %c64 = arith.constant 64 : index
    %c0_22 = arith.constant 0 : index
    %41 = vector.load %arg12[%c64, %c0_22] : memref<144x512xbf16, #tpu.memory_space<vmem>>, vector<4x512xbf16>
    tpu.vector_store %arg12[%c64, %c0_22], %8 {strides = array<i32>} : memref<144x512xbf16, #tpu.memory_space<vmem>>, vector<4x512xbf16>,
    %cst_23 = arith.constant 0.000000e+00 : bf16
    %42 = vector.broadcast %cst_23 : bf16 to vector<12x512xbf16>
    %c68 = arith.constant 68 : index
    %c0_24 = arith.constant 0 : index
    %43 = vector.load %arg12[%c68, %c0_24] : memref<144x512xbf16, #tpu.memory_space<vmem>>, vector<12x512xbf16>
    tpu.vector_store %arg12[%c68, %c0_24], %42 {strides = array<i32>} : memref<144x512xbf16, #tpu.memory_space<vmem>>, vector<12x512xbf16>,
    %44 = vector.extract_strided_slice %8 {offsets = [0, 1], sizes = [4, 511], strides = [1, 1]} : vector<4x512xbf16> to vector<4x511xbf16>
    %45 = vector.extract_strided_slice %8 {offsets = [0, 0], sizes = [4, 1], strides = [1, 1]} : vector<4x512xbf16> to vector<4x1xbf16>
    %46 = tpu.concatenate %44, %45 in 1 : vector<4x511xbf16>, vector<4x1xbf16> -> vector<4x512xbf16>
    %47 = vector.broadcast %4 : vector<1x512xbf16> to vector<4x512xbf16>
    %48 = arith.mulf %46, %47 : vector<4x512xbf16>
    %c80 = arith.constant 80 : index
    %c0_25 = arith.constant 0 : index
    %49 = vector.load %arg12[%c80, %c0_25] : memref<144x512xbf16, #tpu.memory_space<vmem>>, vector<4x512xbf16>
    tpu.vector_store %arg12[%c80, %c0_25], %48 {strides = array<i32>} : memref<144x512xbf16, #tpu.memory_space<vmem>>, vector<4x512xbf16>,
    %cst_26 = arith.constant 0.000000e+00 : bf16
    %50 = vector.broadcast %cst_26 : bf16 to vector<12x512xbf16>
    %c84 = arith.constant 84 : index
    %c0_27 = arith.constant 0 : index
    %51 = vector.load %arg12[%c84, %c0_27] : memref<144x512xbf16, #tpu.memory_space<vmem>>, vector<12x512xbf16>
    tpu.vector_store %arg12[%c84, %c0_27], %50 {strides = array<i32>} : memref<144x512xbf16, #tpu.memory_space<vmem>>, vector<12x512xbf16>,
    %52 = vector.extract_strided_slice %8 {offsets = [0, 15], sizes = [4, 497], strides = [1, 1]} : vector<4x512xbf16> to vector<4x497xbf16>
    %53 = vector.extract_strided_slice %8 {offsets = [0, 0], sizes = [4, 15], strides = [1, 1]} : vector<4x512xbf16> to vector<4x15xbf16>
    %54 = tpu.concatenate %52, %53 in 1 : vector<4x497xbf16>, vector<4x15xbf16> -> vector<4x512xbf16>
    %55 = vector.broadcast %5 : vector<1x512xbf16> to vector<4x512xbf16>
    %56 = arith.mulf %54, %55 : vector<4x512xbf16>
    %c96 = arith.constant 96 : index
    %c0_28 = arith.constant 0 : index
    %57 = vector.load %arg12[%c96, %c0_28] : memref<144x512xbf16, #tpu.memory_space<vmem>>, vector<4x512xbf16>
    tpu.vector_store %arg12[%c96, %c0_28], %56 {strides = array<i32>} : memref<144x512xbf16, #tpu.memory_space<vmem>>, vector<4x512xbf16>,
    %cst_29 = arith.constant 0.000000e+00 : bf16
    %58 = vector.broadcast %cst_29 : bf16 to vector<12x512xbf16>
    %c100 = arith.constant 100 : index
    %c0_30 = arith.constant 0 : index
    %59 = vector.load %arg12[%c100, %c0_30] : memref<144x512xbf16, #tpu.memory_space<vmem>>, vector<12x512xbf16>
    tpu.vector_store %arg12[%c100, %c0_30], %58 {strides = array<i32>} : memref<144x512xbf16, #tpu.memory_space<vmem>>, vector<12x512xbf16>,
    %60 = vector.extract_strided_slice %8 {offsets = [0, 16], sizes = [4, 496], strides = [1, 1]} : vector<4x512xbf16> to vector<4x496xbf16>
    %61 = vector.extract_strided_slice %8 {offsets = [0, 0], sizes = [4, 16], strides = [1, 1]} : vector<4x512xbf16> to vector<4x16xbf16>
    %62 = tpu.concatenate %60, %61 in 1 : vector<4x496xbf16>, vector<4x16xbf16> -> vector<4x512xbf16>
    %63 = vector.broadcast %6 : vector<1x512xbf16> to vector<4x512xbf16>
    %64 = arith.mulf %62, %63 : vector<4x512xbf16>
    %c112 = arith.constant 112 : index
    %c0_31 = arith.constant 0 : index
    %65 = vector.load %arg12[%c112, %c0_31] : memref<144x512xbf16, #tpu.memory_space<vmem>>, vector<4x512xbf16>
    tpu.vector_store %arg12[%c112, %c0_31], %64 {strides = array<i32>} : memref<144x512xbf16, #tpu.memory_space<vmem>>, vector<4x512xbf16>,
    %cst_32 = arith.constant 0.000000e+00 : bf16
    %66 = vector.broadcast %cst_32 : bf16 to vector<12x512xbf16>
    %c116 = arith.constant 116 : index
    %c0_33 = arith.constant 0 : index
    %67 = vector.load %arg12[%c116, %c0_33] : memref<144x512xbf16, #tpu.memory_space<vmem>>, vector<12x512xbf16>
    tpu.vector_store %arg12[%c116, %c0_33], %66 {strides = array<i32>} : memref<144x512xbf16, #tpu.memory_space<vmem>>, vector<12x512xbf16>,
    %68 = vector.extract_strided_slice %8 {offsets = [0, 17], sizes = [4, 495], strides = [1, 1]} : vector<4x512xbf16> to vector<4x495xbf16>
    %69 = vector.extract_strided_slice %8 {offsets = [0, 0], sizes = [4, 17], strides = [1, 1]} : vector<4x512xbf16> to vector<4x17xbf16>
    %70 = tpu.concatenate %68, %69 in 1 : vector<4x495xbf16>, vector<4x17xbf16> -> vector<4x512xbf16>
    %71 = vector.broadcast %7 : vector<1x512xbf16> to vector<4x512xbf16>
    %72 = arith.mulf %70, %71 : vector<4x512xbf16>
    %c128 = arith.constant 128 : index
    %c0_34 = arith.constant 0 : index
    %73 = vector.load %arg12[%c128, %c0_34] : memref<144x512xbf16, #tpu.memory_space<vmem>>, vector<4x512xbf16>
    tpu.vector_store %arg12[%c128, %c0_34], %72 {strides = array<i32>} : memref<144x512xbf16, #tpu.memory_space<vmem>>, vector<4x512xbf16>,
    %cst_35 = arith.constant 0.000000e+00 : bf16
    %74 = vector.broadcast %cst_35 : bf16 to vector<12x512xbf16>
    %c132 = arith.constant 132 : index
    %c0_36 = arith.constant 0 : index
    %75 = vector.load %arg12[%c132, %c0_36] : memref<144x512xbf16, #tpu.memory_space<vmem>>, vector<12x512xbf16>
    tpu.vector_store %arg12[%c132, %c0_36], %74 {strides = array<i32>} : memref<144x512xbf16, #tpu.memory_space<vmem>>, vector<12x512xbf16>,
    %c0_37 = arith.constant 0 : index
    %c0_38 = arith.constant 0 : index
    %76 = vector.load %arg2[%c0_37, %c0_38] : memref<8x144xbf16, #tpu.memory_space<vmem>>, vector<8x144xbf16>
    %c0_39 = arith.constant 0 : index
    %c0_40 = arith.constant 0 : index
    %77 = vector.load %arg12[%c0_39, %c0_40] : memref<144x512xbf16, #tpu.memory_space<vmem>>, vector<144x512xbf16>
    %cst_41 = arith.constant dense<0.000000e+00> : vector<8x512xf32>
    %78 = tpu.matmul %76, %77, %cst_41 {dimension_numbers = #tpu.dot_dimension_numbers<[1], [0], [0], [1], [0, 0, 1, 1], [], []>} : vector<8x144xbf16>, vector<144x512xbf16>, vector<8x512xf32> -> vector<8x512xf32>
    %cst_42 = arith.constant dense<0.000000e+00> : vector<8xf32>
    %79 = vector.multi_reduction <add>, %78, %cst_42 [1] : vector<8x512xf32> to vector<8xf32>
    %80 = vector.shape_cast %79 : vector<8xf32> to vector<8x1xf32>
    %cst_43 = arith.constant 0.001953125 : f32
    %81 = vector.broadcast %cst_43 : f32 to vector<8x1xf32>
    %82 = arith.mulf %80, %81 : vector<8x1xf32>
    %83 = arith.mulf %78, %78 : vector<8x512xf32>
    %cst_44 = arith.constant dense<0.000000e+00> : vector<8xf32>
    %84 = vector.multi_reduction <add>, %83, %cst_44 [1] : vector<8x512xf32> to vector<8xf32>
    %85 = vector.shape_cast %84 : vector<8xf32> to vector<8x1xf32>
    %cst_45 = arith.constant 0.001953125 : f32
    %86 = vector.broadcast %cst_45 : f32 to vector<8x1xf32>
    %87 = arith.mulf %85, %86 : vector<8x1xf32>
    %88 = arith.mulf %82, %82 : vector<8x1xf32>
    %89 = arith.subf %87, %88 : vector<8x1xf32>
    %cst_46 = arith.constant 0.000000e+00 : f32
    %90 = vector.broadcast %cst_46 : f32 to vector<8x1xf32>
    %91 = arith.maximumf %89, %90 : vector<8x1xf32>
    %c0_47 = arith.constant 0 : index
    %c0_48 = arith.constant 0 : index
    %92 = vector.load %arg3[%c0_47, %c0_48] : memref<8x1xf32, #tpu.memory_space<vmem>>, vector<8x1xf32>
    %cst_49 = arith.constant 9.99999974E-6 : f32
    %93 = vector.broadcast %cst_49 : f32 to vector<8x1xf32>
    %94 = arith.addf %91, %93 : vector<8x1xf32>
    %95 = math.rsqrt %94 : vector<8x1xf32>
    %96 = arith.mulf %92, %95 : vector<8x1xf32>
    %c0_50 = arith.constant 0 : index
    %c0_51 = arith.constant 0 : index
    %97 = vector.load %arg4[%c0_50, %c0_51] : memref<8x1xf32, #tpu.memory_space<vmem>>, vector<8x1xf32>
    %98 = arith.mulf %82, %96 : vector<8x1xf32>
    %99 = arith.subf %97, %98 : vector<8x1xf32>
    %100 = vector.broadcast %96 : vector<8x1xf32> to vector<8x512xf32>
    %101 = arith.mulf %78, %100 : vector<8x512xf32>
    %102 = vector.broadcast %99 : vector<8x1xf32> to vector<8x512xf32>
    %103 = arith.addf %101, %102 : vector<8x512xf32>
    %cst_52 = arith.constant 0.000000e+00 : f32
    %104 = vector.broadcast %cst_52 : f32 to vector<8x512xf32>
    %105 = arith.maximumf %103, %104 : vector<8x512xf32>
    %106 = arith.truncf %105 : vector<8x512xf32> to vector<8x512xbf16>
    %107 = vector.extract_strided_slice %106 {offsets = [0, 495], sizes = [8, 17], strides = [1, 1]} : vector<8x512xbf16> to vector<8x17xbf16>
    %108 = vector.extract_strided_slice %106 {offsets = [0, 0], sizes = [8, 495], strides = [1, 1]} : vector<8x512xbf16> to vector<8x495xbf16>
    %109 = tpu.concatenate %107, %108 in 1 : vector<8x17xbf16>, vector<8x495xbf16> -> vector<8x512xbf16>
    %110 = vector.broadcast %0 : vector<1x512xbf16> to vector<8x512xbf16>
    %111 = arith.mulf %109, %110 : vector<8x512xbf16>
    %c0_53 = arith.constant 0 : index
    %c0_54 = arith.constant 0 : index
    %112 = vector.load %arg12[%c0_53, %c0_54] : memref<144x512xbf16, #tpu.memory_space<vmem>>, vector<8x512xbf16>
    tpu.vector_store %arg12[%c0_53, %c0_54], %111 {strides = array<i32>} : memref<144x512xbf16, #tpu.memory_space<vmem>>, vector<8x512xbf16>,
    %113 = vector.extract_strided_slice %106 {offsets = [0, 496], sizes = [8, 16], strides = [1, 1]} : vector<8x512xbf16> to vector<8x16xbf16>
    %114 = vector.extract_strided_slice %106 {offsets = [0, 0], sizes = [8, 496], strides = [1, 1]} : vector<8x512xbf16> to vector<8x496xbf16>
    %115 = tpu.concatenate %113, %114 in 1 : vector<8x16xbf16>, vector<8x496xbf16> -> vector<8x512xbf16>
    %116 = vector.broadcast %1 : vector<1x512xbf16> to vector<8x512xbf16>
    %117 = arith.mulf %115, %116 : vector<8x512xbf16>
    %c16_55 = arith.constant 16 : index
    %c0_56 = arith.constant 0 : index
    %118 = vector.load %arg12[%c16_55, %c0_56] : memref<144x512xbf16, #tpu.memory_space<vmem>>, vector<8x512xbf16>
    tpu.vector_store %arg12[%c16_55, %c0_56], %117 {strides = array<i32>} : memref<144x512xbf16, #tpu.memory_space<vmem>>, vector<8x512xbf16>,
    %119 = vector.extract_strided_slice %106 {offsets = [0, 497], sizes = [8, 15], strides = [1, 1]} : vector<8x512xbf16> to vector<8x15xbf16>
    %120 = vector.extract_strided_slice %106 {offsets = [0, 0], sizes = [8, 497], strides = [1, 1]} : vector<8x512xbf16> to vector<8x497xbf16>
    %121 = tpu.concatenate %119, %120 in 1 : vector<8x15xbf16>, vector<8x497xbf16> -> vector<8x512xbf16>
    %122 = vector.broadcast %2 : vector<1x512xbf16> to vector<8x512xbf16>
    %123 = arith.mulf %121, %122 : vector<8x512xbf16>
    %c32_57 = arith.constant 32 : index
    %c0_58 = arith.constant 0 : index
    %124 = vector.load %arg12[%c32_57, %c0_58] : memref<144x512xbf16, #tpu.memory_space<vmem>>, vector<8x512xbf16>
    tpu.vector_store %arg12[%c32_57, %c0_58], %123 {strides = array<i32>} : memref<144x512xbf16, #tpu.memory_space<vmem>>, vector<8x512xbf16>,
    %125 = vector.extract_strided_slice %106 {offsets = [0, 511], sizes = [8, 1], strides = [1, 1]} : vector<8x512xbf16> to vector<8x1xbf16>
    %126 = vector.extract_strided_slice %106 {offsets = [0, 0], sizes = [8, 511], strides = [1, 1]} : vector<8x512xbf16> to vector<8x511xbf16>
    %127 = tpu.concatenate %125, %126 in 1 : vector<8x1xbf16>, vector<8x511xbf16> -> vector<8x512xbf16>
    %128 = vector.broadcast %3 : vector<1x512xbf16> to vector<8x512xbf16>
    %129 = arith.mulf %127, %128 : vector<8x512xbf16>
    %c48_59 = arith.constant 48 : index
    %c0_60 = arith.constant 0 : index
    %130 = vector.load %arg12[%c48_59, %c0_60] : memref<144x512xbf16, #tpu.memory_space<vmem>>, vector<8x512xbf16>
    tpu.vector_store %arg12[%c48_59, %c0_60], %129 {strides = array<i32>} : memref<144x512xbf16, #tpu.memory_space<vmem>>, vector<8x512xbf16>,
    %c64_61 = arith.constant 64 : index
    %c0_62 = arith.constant 0 : index
    %131 = vector.load %arg12[%c64_61, %c0_62] : memref<144x512xbf16, #tpu.memory_space<vmem>>, vector<8x512xbf16>
    tpu.vector_store %arg12[%c64_61, %c0_62], %106 {strides = array<i32>} : memref<144x512xbf16, #tpu.memory_space<vmem>>, vector<8x512xbf16>,
    %132 = vector.extract_strided_slice %106 {offsets = [0, 1], sizes = [8, 511], strides = [1, 1]} : vector<8x512xbf16> to vector<8x511xbf16>
    %133 = vector.extract_strided_slice %106 {offsets = [0, 0], sizes = [8, 1], strides = [1, 1]} : vector<8x512xbf16> to vector<8x1xbf16>
    %134 = tpu.concatenate %132, %133 in 1 : vector<8x511xbf16>, vector<8x1xbf16> -> vector<8x512xbf16>
    %135 = vector.broadcast %4 : vector<1x512xbf16> to vector<8x512xbf16>
    %136 = arith.mulf %134, %135 : vector<8x512xbf16>
    %c80_63 = arith.constant 80 : index
    %c0_64 = arith.constant 0 : index
    %137 = vector.load %arg12[%c80_63, %c0_64] : memref<144x512xbf16, #tpu.memory_space<vmem>>, vector<8x512xbf16>
    tpu.vector_store %arg12[%c80_63, %c0_64], %136 {strides = array<i32>} : memref<144x512xbf16, #tpu.memory_space<vmem>>, vector<8x512xbf16>,
    %138 = vector.extract_strided_slice %106 {offsets = [0, 15], sizes = [8, 497], strides = [1, 1]} : vector<8x512xbf16> to vector<8x497xbf16>
    %139 = vector.extract_strided_slice %106 {offsets = [0, 0], sizes = [8, 15], strides = [1, 1]} : vector<8x512xbf16> to vector<8x15xbf16>
    %140 = tpu.concatenate %138, %139 in 1 : vector<8x497xbf16>, vector<8x15xbf16> -> vector<8x512xbf16>
    %141 = vector.broadcast %5 : vector<1x512xbf16> to vector<8x512xbf16>
    %142 = arith.mulf %140, %141 : vector<8x512xbf16>
    %c96_65 = arith.constant 96 : index
    %c0_66 = arith.constant 0 : index
    %143 = vector.load %arg12[%c96_65, %c0_66] : memref<144x512xbf16, #tpu.memory_space<vmem>>, vector<8x512xbf16>
    tpu.vector_store %arg12[%c96_65, %c0_66], %142 {strides = array<i32>} : memref<144x512xbf16, #tpu.memory_space<vmem>>, vector<8x512xbf16>,
    %144 = vector.extract_strided_slice %106 {offsets = [0, 16], sizes = [8, 496], strides = [1, 1]} : vector<8x512xbf16> to vector<8x496xbf16>
    %145 = vector.extract_strided_slice %106 {offsets = [0, 0], sizes = [8, 16], strides = [1, 1]} : vector<8x512xbf16> to vector<8x16xbf16>
    %146 = tpu.concatenate %144, %145 in 1 : vector<8x496xbf16>, vector<8x16xbf16> -> vector<8x512xbf16>
    %147 = vector.broadcast %6 : vector<1x512xbf16> to vector<8x512xbf16>
    %148 = arith.mulf %146, %147 : vector<8x512xbf16>
    %c112_67 = arith.constant 112 : index
    %c0_68 = arith.constant 0 : index
    %149 = vector.load %arg12[%c112_67, %c0_68] : memref<144x512xbf16, #tpu.memory_space<vmem>>, vector<8x512xbf16>
    tpu.vector_store %arg12[%c112_67, %c0_68], %148 {strides = array<i32>} : memref<144x512xbf16, #tpu.memory_space<vmem>>, vector<8x512xbf16>,
    %150 = vector.extract_strided_slice %106 {offsets = [0, 17], sizes = [8, 495], strides = [1, 1]} : vector<8x512xbf16> to vector<8x495xbf16>
    %151 = vector.extract_strided_slice %106 {offsets = [0, 0], sizes = [8, 17], strides = [1, 1]} : vector<8x512xbf16> to vector<8x17xbf16>
    %152 = tpu.concatenate %150, %151 in 1 : vector<8x495xbf16>, vector<8x17xbf16> -> vector<8x512xbf16>
    %153 = vector.broadcast %7 : vector<1x512xbf16> to vector<8x512xbf16>
    %154 = arith.mulf %152, %153 : vector<8x512xbf16>
    %c128_69 = arith.constant 128 : index
    %c0_70 = arith.constant 0 : index
    %155 = vector.load %arg12[%c128_69, %c0_70] : memref<144x512xbf16, #tpu.memory_space<vmem>>, vector<8x512xbf16>
    tpu.vector_store %arg12[%c128_69, %c0_70], %154 {strides = array<i32>} : memref<144x512xbf16, #tpu.memory_space<vmem>>, vector<8x512xbf16>,
    %c0_71 = arith.constant 0 : index
    %c0_72 = arith.constant 0 : index
    %156 = vector.load %arg5[%c0_71, %c0_72] : memref<8x144xbf16, #tpu.memory_space<vmem>>, vector<8x144xbf16>
    %c0_73 = arith.constant 0 : index
    %c0_74 = arith.constant 0 : index
    %157 = vector.load %arg12[%c0_73, %c0_74] : memref<144x512xbf16, #tpu.memory_space<vmem>>, vector<144x512xbf16>
    %cst_75 = arith.constant dense<0.000000e+00> : vector<8x512xf32>
    %158 = tpu.matmul %156, %157, %cst_75 {dimension_numbers = #tpu.dot_dimension_numbers<[1], [0], [0], [1], [0, 0, 1, 1], [], []>} : vector<8x144xbf16>, vector<144x512xbf16>, vector<8x512xf32> -> vector<8x512xf32>
    %cst_76 = arith.constant dense<0.000000e+00> : vector<8xf32>
    %159 = vector.multi_reduction <add>, %158, %cst_76 [1] : vector<8x512xf32> to vector<8xf32>
    %160 = vector.shape_cast %159 : vector<8xf32> to vector<8x1xf32>
    %cst_77 = arith.constant 0.001953125 : f32
    %161 = vector.broadcast %cst_77 : f32 to vector<8x1xf32>
    %162 = arith.mulf %160, %161 : vector<8x1xf32>
    %163 = arith.mulf %158, %158 : vector<8x512xf32>
    %cst_78 = arith.constant dense<0.000000e+00> : vector<8xf32>
    %164 = vector.multi_reduction <add>, %163, %cst_78 [1] : vector<8x512xf32> to vector<8xf32>
    %165 = vector.shape_cast %164 : vector<8xf32> to vector<8x1xf32>
    %cst_79 = arith.constant 0.001953125 : f32
    %166 = vector.broadcast %cst_79 : f32 to vector<8x1xf32>
    %167 = arith.mulf %165, %166 : vector<8x1xf32>
    %168 = arith.mulf %162, %162 : vector<8x1xf32>
    %169 = arith.subf %167, %168 : vector<8x1xf32>
    %cst_80 = arith.constant 0.000000e+00 : f32
    %170 = vector.broadcast %cst_80 : f32 to vector<8x1xf32>
    %171 = arith.maximumf %169, %170 : vector<8x1xf32>
    %c0_81 = arith.constant 0 : index
    %c0_82 = arith.constant 0 : index
    %172 = vector.load %arg6[%c0_81, %c0_82] : memref<8x1xf32, #tpu.memory_space<vmem>>, vector<8x1xf32>
    %cst_83 = arith.constant 9.99999974E-6 : f32
    %173 = vector.broadcast %cst_83 : f32 to vector<8x1xf32>
    %174 = arith.addf %171, %173 : vector<8x1xf32>
    %175 = math.rsqrt %174 : vector<8x1xf32>
    %176 = arith.mulf %172, %175 : vector<8x1xf32>
    %c0_84 = arith.constant 0 : index
    %c0_85 = arith.constant 0 : index
    %177 = vector.load %arg7[%c0_84, %c0_85] : memref<8x1xf32, #tpu.memory_space<vmem>>, vector<8x1xf32>
    %178 = arith.mulf %162, %176 : vector<8x1xf32>
    %179 = arith.subf %177, %178 : vector<8x1xf32>
    %180 = vector.broadcast %176 : vector<8x1xf32> to vector<8x512xf32>
    %181 = arith.mulf %158, %180 : vector<8x512xf32>
    %182 = vector.broadcast %179 : vector<8x1xf32> to vector<8x512xf32>
    %183 = arith.addf %181, %182 : vector<8x512xf32>
    %c0_86 = arith.constant 0 : index
    %c0_87 = arith.constant 0 : index
    %184 = vector.load %arg8[%c0_86, %c0_87] : memref<8x8xbf16, #tpu.memory_space<vmem>>, vector<8x8xbf16>
    %185 = arith.truncf %183 : vector<8x512xf32> to vector<8x512xbf16>
    %cst_88 = arith.constant dense<0.000000e+00> : vector<8x512xf32>
    %186 = tpu.matmul %184, %185, %cst_88 {dimension_numbers = #tpu.dot_dimension_numbers<[1], [0], [0], [1], [0, 0, 1, 1], [], []>} : vector<8x8xbf16>, vector<8x512xbf16>, vector<8x512xf32> -> vector<8x512xf32>
    %cst_89 = arith.constant dense<0.000000e+00> : vector<8xf32>
    %187 = vector.multi_reduction <add>, %186, %cst_89 [1] : vector<8x512xf32> to vector<8xf32>
    %188 = vector.shape_cast %187 : vector<8xf32> to vector<8x1xf32>
    %cst_90 = arith.constant 0.001953125 : f32
    %189 = vector.broadcast %cst_90 : f32 to vector<8x1xf32>
    %190 = arith.mulf %188, %189 : vector<8x1xf32>
    %191 = arith.mulf %186, %186 : vector<8x512xf32>
    %cst_91 = arith.constant dense<0.000000e+00> : vector<8xf32>
    %192 = vector.multi_reduction <add>, %191, %cst_91 [1] : vector<8x512xf32> to vector<8xf32>
    %193 = vector.shape_cast %192 : vector<8xf32> to vector<8x1xf32>
    %cst_92 = arith.constant 0.001953125 : f32
    %194 = vector.broadcast %cst_92 : f32 to vector<8x1xf32>
    %195 = arith.mulf %193, %194 : vector<8x1xf32>
    %196 = arith.mulf %190, %190 : vector<8x1xf32>
    %197 = arith.subf %195, %196 : vector<8x1xf32>
    %cst_93 = arith.constant 0.000000e+00 : f32
    %198 = vector.broadcast %cst_93 : f32 to vector<8x1xf32>
    %199 = arith.maximumf %197, %198 : vector<8x1xf32>
    %c0_94 = arith.constant 0 : index
    %c0_95 = arith.constant 0 : index
    %200 = vector.load %arg9[%c0_94, %c0_95] : memref<8x1xf32, #tpu.memory_space<vmem>>, vector<8x1xf32>
    %cst_96 = arith.constant 9.99999974E-6 : f32
    %201 = vector.broadcast %cst_96 : f32 to vector<8x1xf32>
    %202 = arith.addf %199, %201 : vector<8x1xf32>
    %203 = math.rsqrt %202 : vector<8x1xf32>
    %204 = arith.mulf %200, %203 : vector<8x1xf32>
    %c0_97 = arith.constant 0 : index
    %c0_98 = arith.constant 0 : index
    %205 = vector.load %arg10[%c0_97, %c0_98] : memref<8x1xf32, #tpu.memory_space<vmem>>, vector<8x1xf32>
    %206 = arith.mulf %190, %204 : vector<8x1xf32>
    %207 = arith.subf %205, %206 : vector<8x1xf32>
    %208 = vector.broadcast %204 : vector<8x1xf32> to vector<8x512xf32>
    %209 = arith.mulf %186, %208 : vector<8x512xf32>
    %210 = vector.broadcast %207 : vector<8x1xf32> to vector<8x512xf32>
    %211 = arith.addf %209, %210 : vector<8x512xf32>
    %212 = arith.addf %183, %211 : vector<8x512xf32>
    %cst_99 = arith.constant 0.000000e+00 : f32
    %213 = vector.broadcast %cst_99 : f32 to vector<8x512xf32>
    %214 = arith.maximumf %212, %213 : vector<8x512xf32>
    %c0_100 = arith.constant 0 : index
    %c0_101 = arith.constant 0 : index
    %215 = vector.load %arg11[%c0_100, %c0_101] : memref<8x512xf32, #tpu.memory_space<vmem>>, vector<8x512xf32>
    tpu.vector_store %arg11[%c0_100, %c0_101], %214 {strides = array<i32>} : memref<8x512xf32, #tpu.memory_space<vmem>>, vector<8x512xf32>,
    return
  }
}

</mosaic_0001>

<llo_original>
// kernel: tpu_custom_call.1
$region0: #{tpu_custom_call.1}
  #allocation0 [shape = 'u32[]', space=smem, size = 0x4, offset = 0x4, fixed_abs, tag = 'smem constant byte address 0x4 - core index']
  #allocation1 [shape = 'u32[144,128]{1,0:T(1,128)}', space=vmem, size = 0x12000, scoped, tag = 'internal scratch']
  #allocation2 [shape = 'bf16[144,512]{1,0:T(16,128)(2,1)}', space=vmem, size = 0x24000, scoped, tag = 'scratch operand']
  %s0 = inlined_call_operand.vmem [shape: bf16[4,512], index: 0, kind: input, shape index: {}]
  %s1 = inlined_call_operand.vmem [shape: bf16[9,512], index: 1, kind: input, shape index: {}]
  %s2 = inlined_call_operand.vmem [shape: bf16[8,144], index: 2, kind: input, shape index: {}]
  %s3 = inlined_call_operand.vmem [shape: f32[8,1], index: 3, kind: input, shape index: {}]
  %s4 = inlined_call_operand.vmem [shape: f32[8,1], index: 4, kind: input, shape index: {}]
  %s5 = inlined_call_operand.vmem [shape: bf16[8,144], index: 5, kind: input, shape index: {}]
  %s6 = inlined_call_operand.vmem [shape: f32[8,1], index: 6, kind: input, shape index: {}]
  %s7 = inlined_call_operand.vmem [shape: f32[8,1], index: 7, kind: input, shape index: {}]
  %s8 = inlined_call_operand.vmem [shape: bf16[8,8], index: 8, kind: input, shape index: {}]
  %s9 = inlined_call_operand.vmem [shape: f32[8,1], index: 9, kind: input, shape index: {}]
  %s10 = inlined_call_operand.vmem [shape: f32[8,1], index: 10, kind: input, shape index: {}]
  %s11 = inlined_call_operand.hbm [shape: f32[8,512], index: 11, kind: output, shape index: {}]
  %s12 = sld [smem:[#allocation0]]
  $region54: #{tpu_custom_call.1} parent=0
    _
  %s14 = ssub.s32 1, %s12
  %s15 = scalar_select 0, %s14, %s12
  $region1: #{tpu_custom_call.1} parent=0
    #allocation3 [shape = 'u8[16384]{0}', space=vmem, size = 0x4000, scoped, tag = 'output window, operand 0, single buffered']
    #allocation4 [shape = 's32[1]{0}', space=sflag, size = 0x4, scoped, tag = 'scoped memory for tpu_custom_call.1']
    %16 = vsyncpa [#allocation4], 0
    // Predicated region
    $region2: #{tpu_custom_call.1} parent=1 // pred_check
      _
    $region3: #{tpu_custom_call.1} parent=1 // pred_check_branch
      %18 = sbr.rel (0) target = $region5
    $region4: #{tpu_custom_call.1} parent=1 // pred_region
      _
    $region5: #{tpu_custom_call.1} parent=1 // pred_fallthru
      _
    // Predicated region
    $region6: #{tpu_custom_call.1} parent=1 // pred_check
      _
    $region7: #{tpu_custom_call.1} parent=1 // pred_check_branch
      %20 = sbr.rel (0) target = $region9
    $region8: #{tpu_custom_call.1} parent=1 // pred_region
      _
    $region9: #{tpu_custom_call.1} parent=1 // pred_fallthru
      _
    // Predicated region
    $region10: #{tpu_custom_call.1} parent=1 // pred_check
      _
    $region11: #{tpu_custom_call.1} parent=1 // pred_check_branch
      %22 = sbr.rel (0) target = $region13
    $region12: #{tpu_custom_call.1} parent=1 // pred_region
      _
    $region13: #{tpu_custom_call.1} parent=1 // pred_fallthru
      _
    // Predicated region
    $region14: #{tpu_custom_call.1} parent=1 // pred_check
      _
    $region15: #{tpu_custom_call.1} parent=1 // pred_check_branch
      %24 = sbr.rel (0) target = $region17
    $region16: #{tpu_custom_call.1} parent=1 // pred_region
      _
    $region17: #{tpu_custom_call.1} parent=1 // pred_fallthru
      _
    // Predicated region
    $region18: #{tpu_custom_call.1} parent=1 // pred_check
      _
    $region19: #{tpu_custom_call.1} parent=1 // pred_check_branch
      %26 = sbr.rel (0) target = $region21
    $region20: #{tpu_custom_call.1} parent=1 // pred_region
      _
    $region21: #{tpu_custom_call.1} parent=1 // pred_fallthru
      _
    // Predicated region
    $region22: #{tpu_custom_call.1} parent=1 // pred_check
      _
    $region23: #{tpu_custom_call.1} parent=1 // pred_check_branch
      %28 = sbr.rel (0) target = $region25
    $region24: #{tpu_custom_call.1} parent=1 // pred_region
      _
    $region25: #{tpu_custom_call.1} parent=1 // pred_fallthru
      _
    // Predicated region
    $region26: #{tpu_custom_call.1} parent=1 // pred_check
      _
    $region27: #{tpu_custom_call.1} parent=1 // pred_check_branch
      %30 = sbr.rel (0) target = $region29
    $region28: #{tpu_custom_call.1} parent=1 // pred_region
      _
    $region29: #{tpu_custom_call.1} parent=1 // pred_fallthru
      _
    // Predicated region
    $region30: #{tpu_custom_call.1} parent=1 // pred_check
      _
    $region31: #{tpu_custom_call.1} parent=1 // pred_check_branch
      %32 = sbr.rel (0) target = $region33
    $region32: #{tpu_custom_call.1} parent=1 // pred_region
      _
    $region33: #{tpu_custom_call.1} parent=1 // pred_fallthru
      _
    // Predicated region
    $region34: #{tpu_custom_call.1} parent=1 // pred_check
      _
    $region35: #{tpu_custom_call.1} parent=1 // pred_check_branch
      %34 = sbr.rel (0) target = $region37
    $region36: #{tpu_custom_call.1} parent=1 // pred_region
      _
    $region37: #{tpu_custom_call.1} parent=1 // pred_fallthru
      _
    // Predicated region
    $region38: #{tpu_custom_call.1} parent=1 // pred_check
      _
    $region39: #{tpu_custom_call.1} parent=1 // pred_check_branch
      %36 = sbr.rel (0) target = $region41
    $region40: #{tpu_custom_call.1} parent=1 // pred_region
      _
    $region41: #{tpu_custom_call.1} parent=1 // pred_fallthru
      _
    // Predicated region
    $region42: #{tpu_custom_call.1} parent=1 // pred_check
      _
    $region43: #{tpu_custom_call.1} parent=1 // pred_check_branch
      %38 = sbr.rel (0) target = $region45
    $region44: #{tpu_custom_call.1} parent=1 // pred_region
      _
    $region45: #{tpu_custom_call.1} parent=1 // pred_fallthru
      _
    %v40 = vld [vmem:[%s1] sm:$0x11]
    %v41 = vld [vmem:[%s1 + $0x8] sm:$0x11]
    %v42 = vld [vmem:[%s1] sm:$0x22]
    %v43 = vld [vmem:[%s1 + $0x8] sm:$0x22]
    %v44 = vld [vmem:[%s1] sm:$0x44]
    %v45 = vld [vmem:[%s1 + $0x8] sm:$0x44]
    %v46 = vld [vmem:[%s1] sm:$0x88]
    %v47 = vld [vmem:[%s1 + $0x8] sm:$0x88]
    %v48 = vld [vmem:[%s1 + $0x10] sm:$0x11]
    %v49 = vld [vmem:[%s1 + $0x18] sm:$0x11]
    %v50 = vld [vmem:[%s0] sm:$0xff]
    %v52 = vcombine.high %v50, %v50
    %v54 = vunpack.c.l.s4 1983009808
    %v55 = vunpack.c.0.s8 %v54
    %v56 = vlaneseq
    %v57 = vshrl.u32 %v56, 7
    %v58 = vsub.s32 %v55, %v57
    %v59 = vrot.slane %v50, %v58
    %v61 = vunpack.c.l.s4 1983009808
    %v62 = vunpack.c.0.s8 %v61
    %v63 = vlaneseq
    %v64 = vshrl.u32 %v63, 7
    %v65 = vsub.s32 %v62, %v64
    %v66 = vrot.slane %v52, %v65
    %v67 = vcombine.high %v66, %v66
    %68 = vrot.lane.b32.xlu0 %v67, 17
    %v69 = vpop.permute.xlu0 %68
    %v70 = vcombine.high %v59, %v59
    %71 = vrot.lane.b32.xlu0 %v59, 17
    %v72 = vpop.permute.xlu0 %71
    %73 = vrot.lane.b32.xlu0 %v70, 17
    %v74 = vpop.permute.xlu0 %73
    %75 = vrot.lane.b32.xlu0 %v66, 17
    %v76 = vpop.permute.xlu0 %75
    %vm77 = vcmask 138240
    %v78 = vsel %vm77, %v72, %v74
    %v79 = vsel %vm77, %v74, %v76
    %v80 = vsel %vm77, %v76, %v69
    %vm84 = vcmask 138240
    %v87 = vsel %vm84, %v69, %v72
    %v91 = vunpack.c.l.b16 %v40
    %v92 = vunpack.c.h.b16 %v40
    %v93 = vunpack.c.l.b16 %v41
    %v94 = vunpack.c.h.b16 %v41
    %v95 = vpack.c.b16 %v91, %v91
    %v96 = vpack.c.b16 %v92, %v92
    %v97 = vpack.c.b16 %v93, %v93
    %v98 = vpack.c.b16 %v94, %v94
    %v100 = vpack.i.b16 %v95, %v95
    %v102 = vlaneseq
    %v103 = vshrl.u32 %v102, 7
    %v104 = vsub.s32 0, %v103
    %v105 = vrot.slane %v100, %v104
    %v107 = vpack.i.b16 %v96, %v96
    %v109 = vlaneseq
    %v110 = vshrl.u32 %v109, 7
    %v111 = vsub.s32 0, %v110
    %v112 = vrot.slane %v107, %v111
    %v114 = vpack.i.b16 %v97, %v97
    %v116 = vlaneseq
    %v117 = vshrl.u32 %v116, 7
    %v118 = vsub.s32 0, %v117
    %v119 = vrot.slane %v114, %v118
    %v121 = vpack.i.b16 %v98, %v98
    %v123 = vlaneseq
    %v124 = vshrl.u32 %v123, 7
    %v125 = vsub.s32 0, %v124
    %v126 = vrot.slane %v121, %v125
    %v127 = vmul.bf16 %v87, %v105
    %v128 = vmul.bf16 %v78, %v112
    %v129 = vmul.bf16 %v79, %v119
    %v130 = vmul.bf16 %v80, %v126
    %131 = vst [vmem:[#allocation2] sm:$0x3] %v127
    %132 = vst [vmem:[#allocation2 + $0x8] sm:$0x3] %v128
    %133 = vst [vmem:[#allocation2 + $0x10] sm:$0x3] %v129
    %134 = vst [vmem:[#allocation2 + $0x18] sm:$0x3] %v130
    %135 = vst [vmem:[#allocation2] sm:$0xfc] 0
    %136 = vst [vmem:[#allocation2 + $0x8] sm:$0xfc] 0
    %137 = vst [vmem:[#allocation2 + $0x10] sm:$0xfc] 0
    %138 = vst [vmem:[#allocation2 + $0x18] sm:$0xfc] 0
    %139 = vrot.lane.b32.xlu0 %v67, 16
    %v140 = vpop.permute.xlu0 %139
    %141 = vrot.lane.b32.xlu0 %v59, 16
    %v142 = vpop.permute.xlu0 %141
    %143 = vrot.lane.b32.xlu0 %v70, 16
    %v144 = vpop.permute.xlu0 %143
    %145 = vrot.lane.b32.xlu0 %v66, 16
    %v146 = vpop.permute.xlu0 %145
    %vm147 = vcmask 130048
    %v148 = vsel %vm147, %v142, %v144
    %v149 = vsel %vm147, %v144, %v146
    %v150 = vsel %vm147, %v146, %v140
    %vm154 = vcmask 130048
    %v157 = vsel %vm154, %v140, %v142
    %v159 = vshrl.u32 %v95, 16
    %v160 = vpack.i.b16 %v159, %v159
    %v162 = vlaneseq
    %v163 = vshrl.u32 %v162, 7
    %v164 = vsub.s32 0, %v163
    %v165 = vrot.slane %v160, %v164
    %v166 = vshrl.u32 %v96, 16
    %v167 = vpack.i.b16 %v166, %v166
    %v169 = vlaneseq
    %v170 = vshrl.u32 %v169, 7
    %v171 = vsub.s32 0, %v170
    %v172 = vrot.slane %v167, %v171
    %v173 = vshrl.u32 %v97, 16
    %v174 = vpack.i.b16 %v173, %v173
    %v176 = vlaneseq
    %v177 = vshrl.u32 %v176, 7
    %v178 = vsub.s32 0, %v177
    %v179 = vrot.slane %v174, %v178
    %v180 = vshrl.u32 %v98, 16
    %v181 = vpack.i.b16 %v180, %v180
    %v183 = vlaneseq
    %v184 = vshrl.u32 %v183, 7
    %v185 = vsub.s32 0, %v184
    %v186 = vrot.slane %v181, %v185
    %v187 = vmul.bf16 %v157, %v165
    %v188 = vmul.bf16 %v148, %v172
    %v189 = vmul.bf16 %v149, %v179
    %v190 = vmul.bf16 %v150, %v186
    %191 = vst [vmem:[#allocation2 + $0x20] sm:$0x3] %v187
    %192 = vst [vmem:[#allocation2 + $0x28] sm:$0x3] %v188
    %193 = vst [vmem:[#allocation2 + $0x30] sm:$0x3] %v189
    %194 = vst [vmem:[#allocation2 + $0x38] sm:$0x3] %v190
    %195 = vst [vmem:[#allocation2 + $0x20] sm:$0xfc] 0
    %196 = vst [vmem:[#allocation2 + $0x28] sm:$0xfc] 0
    %197 = vst [vmem:[#allocation2 + $0x30] sm:$0xfc] 0
    %198 = vst [vmem:[#allocation2 + $0x38] sm:$0xfc] 0
    %199 = vrot.lane.b32.xlu0 %v67, 15
    %v200 = vpop.permute.xlu0 %199
    %201 = vrot.lane.b32.xlu0 %v59, 15
    %v202 = vpop.permute.xlu0 %201
    %203 = vrot.lane.b32.xlu0 %v70, 15
    %v204 = vpop.permute.xlu0 %203
    %205 = vrot.lane.b32.xlu0 %v66, 15
    %v206 = vpop.permute.xlu0 %205
    %vm207 = vcmask 121856
    %v208 = vsel %vm207, %v202, %v204
    %v209 = vsel %vm207, %v204, %v206
    %v210 = vsel %vm207, %v206, %v200
    %vm214 = vcmask 121856
    %v217 = vsel %vm214, %v200, %v202
    %v221 = vunpack.c.l.b16 %v42
    %v222 = vunpack.c.h.b16 %v42
    %v223 = vunpack.c.l.b16 %v43
    %v224 = vunpack.c.h.b16 %v43
    %v225 = vpack.c.b16 %v221, %v221
    %v226 = vpack.c.b16 %v222, %v222
    %v227 = vpack.c.b16 %v223, %v223
    %v228 = vpack.c.b16 %v224, %v224
    %v230 = vpack.i.b16 %v225, %v225
    %v232 = vlaneseq
    %v233 = vshrl.u32 %v232, 7
    %v234 = vsub.s32 1, %v233
    %v235 = vrot.slane %v230, %v234
    %v237 = vpack.i.b16 %v226, %v226
    %v239 = vlaneseq
    %v240 = vshrl.u32 %v239, 7
    %v241 = vsub.s32 1, %v240
    %v242 = vrot.slane %v237, %v241
    %v244 = vpack.i.b16 %v227, %v227
    %v246 = vlaneseq
    %v247 = vshrl.u32 %v246, 7
    %v248 = vsub.s32 1, %v247
    %v249 = vrot.slane %v244, %v248
    %v251 = vpack.i.b16 %v228, %v228
    %v253 = vlaneseq
    %v254 = vshrl.u32 %v253, 7
    %v255 = vsub.s32 1, %v254
    %v256 = vrot.slane %v251, %v255
    %v257 = vmul.bf16 %v217, %v235
    %v258 = vmul.bf16 %v208, %v242
    %v259 = vmul.bf16 %v209, %v249
    %v260 = vmul.bf16 %v210, %v256
    %261 = vst [vmem:[#allocation2 + $0x40] sm:$0x3] %v257
    %262 = vst [vmem:[#allocation2 + $0x48] sm:$0x3] %v258
    %263 = vst [vmem:[#allocation2 + $0x50] sm:$0x3] %v259
    %264 = vst [vmem:[#allocation2 + $0x58] sm:$0x3] %v260
    %265 = vst [vmem:[#allocation2 + $0x40] sm:$0xfc] 0
    %266 = vst [vmem:[#allocation2 + $0x48] sm:$0xfc] 0
    %267 = vst [vmem:[#allocation2 + $0x50] sm:$0xfc] 0
    %268 = vst [vmem:[#allocation2 + $0x58] sm:$0xfc] 0
    %269 = vrot.lane.b32.xlu0 %v67, 1
    %v270 = vpop.permute.xlu0 %269
    %271 = vrot.lane.b32.xlu0 %v59, 1
    %v272 = vpop.permute.xlu0 %271
    %273 = vrot.lane.b32.xlu0 %v70, 1
    %v274 = vpop.permute.xlu0 %273
    %275 = vrot.lane.b32.xlu0 %v66, 1
    %v276 = vpop.permute.xlu0 %275
    %vm277 = vcmask 7168
    %v278 = vsel %vm277, %v272, %v274
    %v279 = vsel %vm277, %v274, %v276
    %v280 = vsel %vm277, %v276, %v270
    %vm284 = vcmask 7168
    %v287 = vsel %vm284, %v270, %v272
    %v289 = vshrl.u32 %v225, 16
    %v290 = vpack.i.b16 %v289, %v289
    %v292 = vlaneseq
    %v293 = vshrl.u32 %v292, 7
    %v294 = vsub.s32 1, %v293
    %v295 = vrot.slane %v290, %v294
    %v296 = vshrl.u32 %v226, 16
    %v297 = vpack.i.b16 %v296, %v296
    %v299 = vlaneseq
    %v300 = vshrl.u32 %v299, 7
    %v301 = vsub.s32 1, %v300
    %v302 = vrot.slane %v297, %v301
    %v303 = vshrl.u32 %v227, 16
    %v304 = vpack.i.b16 %v303, %v303
    %v306 = vlaneseq
    %v307 = vshrl.u32 %v306, 7
    %v308 = vsub.s32 1, %v307
    %v309 = vrot.slane %v304, %v308
    %v310 = vshrl.u32 %v228, 16
    %v311 = vpack.i.b16 %v310, %v310
    %v313 = vlaneseq
    %v314 = vshrl.u32 %v313, 7
    %v315 = vsub.s32 1, %v314
    %v316 = vrot.slane %v311, %v315
    %v317 = vmul.bf16 %v287, %v295
    %v318 = vmul.bf16 %v278, %v302
    %v319 = vmul.bf16 %v279, %v309
    %v320 = vmul.bf16 %v280, %v316
    %321 = vst [vmem:[#allocation2 + $0x60] sm:$0x3] %v317
    %322 = vst [vmem:[#allocation2 + $0x68] sm:$0x3] %v318
    %323 = vst [vmem:[#allocation2 + $0x70] sm:$0x3] %v319
    %324 = vst [vmem:[#allocation2 + $0x78] sm:$0x3] %v320
    %325 = vst [vmem:[#allocation2 + $0x60] sm:$0xfc] 0
    %326 = vst [vmem:[#allocation2 + $0x68] sm:$0xfc] 0
    %327 = vst [vmem:[#allocation2 + $0x70] sm:$0xfc] 0
    %328 = vst [vmem:[#allocation2 + $0x78] sm:$0xfc] 0
    %333 = vst [vmem:[#allocation2 + $0x80] sm:$0x3] %v59
    %334 = vst [vmem:[#allocation2 + $0x88] sm:$0x3] %v70
    %335 = vst [vmem:[#allocation2 + $0x90] sm:$0x3] %v66
    %336 = vst [vmem:[#allocation2 + $0x98] sm:$0x3] %v67
    %337 = vst [vmem:[#allocation2 + $0x80] sm:$0xfc] 0
    %338 = vst [vmem:[#allocation2 + $0x88] sm:$0xfc] 0
    %339 = vst [vmem:[#allocation2 + $0x90] sm:$0xfc] 0
    %340 = vst [vmem:[#allocation2 + $0x98] sm:$0xfc] 0
    %341 = vrot.lane.b32.xlu0 %v59, 127
    %v342 = vpop.permute.xlu0 %341
    %343 = vrot.lane.b32.xlu0 %v70, 127
    %v344 = vpop.permute.xlu0 %343
    %345 = vrot.lane.b32.xlu0 %v66, 127
    %v346 = vpop.permute.xlu0 %345
    %347 = vrot.lane.b32.xlu0 %v67, 127
    %v348 = vpop.permute.xlu0 %347
    %vm349 = vcmask 1039360
    %v350 = vsel %vm349, %v342, %v344
    %v351 = vsel %vm349, %v344, %v346
    %v352 = vsel %vm349, %v346, %v348
    %vm356 = vcmask 1039360
    %v359 = vsel %vm356, %v348, %v342
    %v363 = vunpack.c.l.b16 %v44
    %v364 = vunpack.c.h.b16 %v44
    %v365 = vunpack.c.l.b16 %v45
    %v366 = vunpack.c.h.b16 %v45
    %v367 = vpack.c.b16 %v363, %v363
    %v368 = vpack.c.b16 %v364, %v364
    %v369 = vpack.c.b16 %v365, %v365
    %v370 = vpack.c.b16 %v366, %v366
    %v372 = vshrl.u32 %v367, 16
    %v373 = vpack.i.b16 %v372, %v372
    %v375 = vlaneseq
    %v376 = vshrl.u32 %v375, 7
    %v377 = vsub.s32 2, %v376
    %v378 = vrot.slane %v373, %v377
    %v380 = vshrl.u32 %v368, 16
    %v381 = vpack.i.b16 %v380, %v380
    %v383 = vlaneseq
    %v384 = vshrl.u32 %v383, 7
    %v385 = vsub.s32 2, %v384
    %v386 = vrot.slane %v381, %v385
    %v388 = vshrl.u32 %v369, 16
    %v389 = vpack.i.b16 %v388, %v388
    %v391 = vlaneseq
    %v392 = vshrl.u32 %v391, 7
    %v393 = vsub.s32 2, %v392
    %v394 = vrot.slane %v389, %v393
    %v396 = vshrl.u32 %v370, 16
    %v397 = vpack.i.b16 %v396, %v396
    %v399 = vlaneseq
    %v400 = vshrl.u32 %v399, 7
    %v401 = vsub.s32 2, %v400
    %v402 = vrot.slane %v397, %v401
    %v403 = vmul.bf16 %v350, %v378
    %v404 = vmul.bf16 %v351, %v386
    %v405 = vmul.bf16 %v352, %v394
    %v406 = vmul.bf16 %v359, %v402
    %407 = vst [vmem:[#allocation2 + $0xa0] sm:$0x3] %v403
    %408 = vst [vmem:[#allocation2 + $0xa8] sm:$0x3] %v404
    %409 = vst [vmem:[#allocation2 + $0xb0] sm:$0x3] %v405
    %410 = vst [vmem:[#allocation2 + $0xb8] sm:$0x3] %v406
    %411 = vst [vmem:[#allocation2 + $0xa0] sm:$0xfc] 0
    %412 = vst [vmem:[#allocation2 + $0xa8] sm:$0xfc] 0
    %413 = vst [vmem:[#allocation2 + $0xb0] sm:$0xfc] 0
    %414 = vst [vmem:[#allocation2 + $0xb8] sm:$0xfc] 0
    %415 = vrot.lane.b32.xlu0 %v59, 113
    %v416 = vpop.permute.xlu0 %415
    %417 = vrot.lane.b32.xlu0 %v70, 113
    %v418 = vpop.permute.xlu0 %417
    %419 = vrot.lane.b32.xlu0 %v66, 113
    %v420 = vpop.permute.xlu0 %419
    %421 = vrot.lane.b32.xlu0 %v67, 113
    %v422 = vpop.permute.xlu0 %421
    %vm423 = vcmask 924672
    %v424 = vsel %vm423, %v416, %v418
    %v425 = vsel %vm423, %v418, %v420
    %v426 = vsel %vm423, %v420, %v422
    %vm430 = vcmask 924672
    %v433 = vsel %vm430, %v422, %v416
    %v437 = vunpack.c.l.b16 %v46
    %v438 = vunpack.c.h.b16 %v46
    %v439 = vunpack.c.l.b16 %v47
    %v440 = vunpack.c.h.b16 %v47
    %v441 = vpack.c.b16 %v437, %v437
    %v442 = vpack.c.b16 %v438, %v438
    %v443 = vpack.c.b16 %v439, %v439
    %v444 = vpack.c.b16 %v440, %v440
    %v446 = vpack.i.b16 %v441, %v441
    %v448 = vlaneseq
    %v449 = vshrl.u32 %v448, 7
    %v450 = vsub.s32 3, %v449
    %v451 = vrot.slane %v446, %v450
    %v453 = vpack.i.b16 %v442, %v442
    %v455 = vlaneseq
    %v456 = vshrl.u32 %v455, 7
    %v457 = vsub.s32 3, %v456
    %v458 = vrot.slane %v453, %v457
    %v460 = vpack.i.b16 %v443, %v443
    %v462 = vlaneseq
    %v463 = vshrl.u32 %v462, 7
    %v464 = vsub.s32 3, %v463
    %v465 = vrot.slane %v460, %v464
    %v467 = vpack.i.b16 %v444, %v444
    %v469 = vlaneseq
    %v470 = vshrl.u32 %v469, 7
    %v471 = vsub.s32 3, %v470
    %v472 = vrot.slane %v467, %v471
    %v473 = vmul.bf16 %v424, %v451
    %v474 = vmul.bf16 %v425, %v458
    %v475 = vmul.bf16 %v426, %v465
    %v476 = vmul.bf16 %v433, %v472
    %477 = vst [vmem:[#allocation2 + $0xc0] sm:$0x3] %v473
    %478 = vst [vmem:[#allocation2 + $0xc8] sm:$0x3] %v474
    %479 = vst [vmem:[#allocation2 + $0xd0] sm:$0x3] %v475
    %480 = vst [vmem:[#allocation2 + $0xd8] sm:$0x3] %v476
    %481 = vst [vmem:[#allocation2 + $0xc0] sm:$0xfc] 0
    %482 = vst [vmem:[#allocation2 + $0xc8] sm:$0xfc] 0
    %483 = vst [vmem:[#allocation2 + $0xd0] sm:$0xfc] 0
    %484 = vst [vmem:[#allocation2 + $0xd8] sm:$0xfc] 0
    %485 = vrot.lane.b32.xlu0 %v59, 112
    %v486 = vpop.permute.xlu0 %485
    %487 = vrot.lane.b32.xlu0 %v70, 112
    %v488 = vpop.permute.xlu0 %487
    %489 = vrot.lane.b32.xlu0 %v66, 112
    %v490 = vpop.permute.xlu0 %489
    %491 = vrot.lane.b32.xlu0 %v67, 112
    %v492 = vpop.permute.xlu0 %491
    %vm493 = vcmask 916480
    %v494 = vsel %vm493, %v486, %v488
    %v495 = vsel %vm493, %v488, %v490
    %v496 = vsel %vm493, %v490, %v492
    %vm500 = vcmask 916480
    %v503 = vsel %vm500, %v492, %v486
    %v505 = vshrl.u32 %v441, 16
    %v506 = vpack.i.b16 %v505, %v505
    %v508 = vlaneseq
    %v509 = vshrl.u32 %v508, 7
    %v510 = vsub.s32 3, %v509
    %v511 = vrot.slane %v506, %v510
    %v512 = vshrl.u32 %v442, 16
    %v513 = vpack.i.b16 %v512, %v512
    %v515 = vlaneseq
    %v516 = vshrl.u32 %v515, 7
    %v517 = vsub.s32 3, %v516
    %v518 = vrot.slane %v513, %v517
    %v519 = vshrl.u32 %v443, 16
    %v520 = vpack.i.b16 %v519, %v519
    %v522 = vlaneseq
    %v523 = vshrl.u32 %v522, 7
    %v524 = vsub.s32 3, %v523
    %v525 = vrot.slane %v520, %v524
    %v526 = vshrl.u32 %v444, 16
    %v527 = vpack.i.b16 %v526, %v526
    %v529 = vlaneseq
    %v530 = vshrl.u32 %v529, 7
    %v531 = vsub.s32 3, %v530
    %v532 = vrot.slane %v527, %v531
    %v533 = vmul.bf16 %v494, %v511
    %v534 = vmul.bf16 %v495, %v518
    %v535 = vmul.bf16 %v496, %v525
    %v536 = vmul.bf16 %v503, %v532
    %537 = vst [vmem:[#allocation2 + $0xe0] sm:$0x3] %v533
    %538 = vst [vmem:[#allocation2 + $0xe8] sm:$0x3] %v534
    %539 = vst [vmem:[#allocation2 + $0xf0] sm:$0x3] %v535
    %540 = vst [vmem:[#allocation2 + $0xf8] sm:$0x3] %v536
    %541 = vst [vmem:[#allocation2 + $0xe0] sm:$0xfc] 0
    %542 = vst [vmem:[#allocation2 + $0xe8] sm:$0xfc] 0
    %543 = vst [vmem:[#allocation2 + $0xf0] sm:$0xfc] 0
    %544 = vst [vmem:[#allocation2 + $0xf8] sm:$0xfc] 0
    %545 = vrot.lane.b32.xlu0 %v59, 111
    %v546 = vpop.permute.xlu0 %545
    %547 = vrot.lane.b32.xlu0 %v70, 111
    %v548 = vpop.permute.xlu0 %547
    %549 = vrot.lane.b32.xlu0 %v66, 111
    %v550 = vpop.permute.xlu0 %549
    %551 = vrot.lane.b32.xlu0 %v67, 111
    %v552 = vpop.permute.xlu0 %551
    %vm553 = vcmask 908288
    %v554 = vsel %vm553, %v546, %v548
    %v555 = vsel %vm553, %v548, %v550
    %v556 = vsel %vm553, %v550, %v552
    %vm560 = vcmask 908288
    %v563 = vsel %vm560, %v552, %v546
    %v567 = vunpack.c.l.b16 %v48
    %v568 = vunpack.c.h.b16 %v48
    %v569 = vunpack.c.l.b16 %v49
    %v570 = vunpack.c.h.b16 %v49
    %v571 = vpack.c.b16 %v567, %v567
    %v572 = vpack.c.b16 %v568, %v568
    %v573 = vpack.c.b16 %v569, %v569
    %v574 = vpack.c.b16 %v570, %v570
    %v576 = vpack.i.b16 %v571, %v571
    %v578 = vlaneseq
    %v579 = vshrl.u32 %v578, 7
    %v580 = vsub.s32 0, %v579
    %v581 = vrot.slane %v576, %v580
    %v583 = vpack.i.b16 %v572, %v572
    %v585 = vlaneseq
    %v586 = vshrl.u32 %v585, 7
    %v587 = vsub.s32 0, %v586
    %v588 = vrot.slane %v583, %v587
    %v590 = vpack.i.b16 %v573, %v573
    %v592 = vlaneseq
    %v593 = vshrl.u32 %v592, 7
    %v594 = vsub.s32 0, %v593
    %v595 = vrot.slane %v590, %v594
    %v597 = vpack.i.b16 %v574, %v574
    %v599 = vlaneseq
    %v600 = vshrl.u32 %v599, 7
    %v601 = vsub.s32 0, %v600
    %v602 = vrot.slane %v597, %v601
    %v603 = vmul.bf16 %v554, %v581
    %v604 = vmul.bf16 %v555, %v588
    %v605 = vmul.bf16 %v556, %v595
    %v606 = vmul.bf16 %v563, %v602
    %607 = vst [vmem:[#allocation2 + $0x100] sm:$0x3] %v603
    %608 = vst [vmem:[#allocation2 + $0x108] sm:$0x3] %v604
    %609 = vst [vmem:[#allocation2 + $0x110] sm:$0x3] %v605
    %610 = vst [vmem:[#allocation2 + $0x118] sm:$0x3] %v606
    %611 = vst [vmem:[#allocation2 + $0x100] sm:$0xfc] 0
    %612 = vst [vmem:[#allocation2 + $0x108] sm:$0xfc] 0
    %613 = vst [vmem:[#allocation2 + $0x110] sm:$0xfc] 0
    %614 = vst [vmem:[#allocation2 + $0x118] sm:$0xfc] 0
    %v615 = vld [vmem:[%s2] sm:$0xff]
    %v616 = vld [vmem:[#allocation2] sm:$0xff]
    %v617 = vld [vmem:[#allocation2 + $0x8] sm:$0xff]
    %v618 = vld [vmem:[#allocation2 + $0x10] sm:$0xff]
    %v619 = vld [vmem:[#allocation2 + $0x18] sm:$0xff]
    %v620 = vld [vmem:[#allocation2 + $0x20] sm:$0xff]
    %v621 = vld [vmem:[#allocation2 + $0x28] sm:$0xff]
    %v622 = vld [vmem:[#allocation2 + $0x30] sm:$0xff]
    %v623 = vld [vmem:[#allocation2 + $0x38] sm:$0xff]
    %v624 = vld [vmem:[#allocation2 + $0x40] sm:$0xff]
    %v625 = vld [vmem:[#allocation2 + $0x48] sm:$0xff]
    %v626 = vld [vmem:[#allocation2 + $0x50] sm:$0xff]
    %v627 = vld [vmem:[#allocation2 + $0x58] sm:$0xff]
    %v628 = vld [vmem:[#allocation2 + $0x60] sm:$0xff]
    %v629 = vld [vmem:[#allocation2 + $0x68] sm:$0xff]
    %v630 = vld [vmem:[#allocation2 + $0x70] sm:$0xff]
    %v631 = vld [vmem:[#allocation2 + $0x78] sm:$0xff]
    %v632 = vld [vmem:[#allocation2 + $0x80] sm:$0xff]
    %v633 = vld [vmem:[#allocation2 + $0x88] sm:$0xff]
    %v634 = vld [vmem:[#allocation2 + $0x90] sm:$0xff]
    %v635 = vld [vmem:[#allocation2 + $0x98] sm:$0xff]
    %v636 = vld [vmem:[#allocation2 + $0xa0] sm:$0xff]
    %v637 = vld [vmem:[#allocation2 + $0xa8] sm:$0xff]
    %v638 = vld [vmem:[#allocation2 + $0xb0] sm:$0xff]
    %v639 = vld [vmem:[#allocation2 + $0xb8] sm:$0xff]
    %v640 = vld [vmem:[#allocation2 + $0xc0] sm:$0xff]
    %v641 = vld [vmem:[#allocation2 + $0xc8] sm:$0xff]
    %v642 = vld [vmem:[#allocation2 + $0xd0] sm:$0xff]
    %v643 = vld [vmem:[#allocation2 + $0xd8] sm:$0xff]
    %v644 = vld [vmem:[#allocation2 + $0xe0] sm:$0xff]
    %v645 = vld [vmem:[#allocation2 + $0xe8] sm:$0xff]
    %v646 = vld [vmem:[#allocation2 + $0xf0] sm:$0xff]
    %v647 = vld [vmem:[#allocation2 + $0xf8] sm:$0xff]
    %v648 = vld [vmem:[#allocation2 + $0x100] sm:$0xff]
    %v649 = vld [vmem:[#allocation2 + $0x108] sm:$0xff]
    %v650 = vld [vmem:[#allocation2 + $0x110] sm:$0xff]
    %v651 = vld [vmem:[#allocation2 + $0x118] sm:$0xff]
    %v653 = vunpack.c.l.b16 %v615
    %v654 = vunpack.c.h.b16 %v615
    %v655 = vpack.c.b16 %v653, %v653
    %v656 = vpack.c.b16 %v654, %v654
    %v659 = vsel %vm154, %v656, 0
    %661 = vmatprep.subr.bf16.mxu0 %v617
    %662 = vmatpush1.bf16.msra.mxu0 %v616
    %663 = vmatprep.subr.bf16.mxu0 %v621
    %664 = vmatpush1.bf16.msra.mxu0 %v620
    %665 = vmatprep.subr.bf16.mxu0 %v625
    %666 = vmatpush1.bf16.msra.mxu0 %v624
    %667 = vmatprep.subr.bf16.mxu0 %v629
    %668 = vmatpush1.bf16.msra.mxu0 %v628
    %669 = vmatprep.subr.bf16.mxu0 %v633
    %670 = vmatpush1.bf16.msra.mxu0 %v632
    %671 = vmatprep.subr.bf16.mxu0 %v637
    %672 = vmatpush1.bf16.msra.mxu0 %v636
    %673 = vmatprep.subr.bf16.mxu0 %v641
    %674 = vmatpush1.bf16.msra.mxu0 %v640
    %675 = vmatprep.subr.bf16.mxu0 %v645
    %676 = vmatpush1.bf16.msra.mxu0 %v644
    %677 = vmatprep.subr.bf16.mxu0 %v649
    %678 = vmatpush1.bf16.msra.mxu0 %v648
    %679 = vmatprep.subr.bf16.mxu0 0
    %680 = vmatpush1.bf16.msra.mxu0 0
    %681 = vmatprep.subr.bf16.mxu0 0
    %682 = vmatpush1.bf16.msra.mxu0 0
    %683 = vmatprep.subr.bf16.mxu0 0
    %684 = vmatpush1.bf16.msra.mxu0 0
    %685 = vmatprep.subr.bf16.mxu0 0
    %686 = vmatpush1.bf16.msra.mxu0 0
    %687 = vmatprep.subr.bf16.mxu0 0
    %688 = vmatpush1.bf16.msra.mxu0 0
    %689 = vmatprep.subr.bf16.mxu0 0
    %690 = vmatpush1.bf16.msra.mxu0 0
    %691 = vmatprep.subr.bf16.mxu0 0
    %692 = vmatpush1.bf16.msra.mxu0 0
    %693 = vmatprep.mubr.bf16.mxu0 %v659
    %694 = vmatmul.mubr.bf16.gmra.mrb[0].mxu0 %v655
    %v695 = vpop.f32.mrb[0].mxu0
    %v696 = vadd.f32 0.0, %v695
    %v697 = vpop.f32.mrb[0].mxu0
    %v698 = vadd.f32 0.0, %v697
    %v699 = vpop.f32.mrb[0].mxu0
    %v700 = vpop.f32.mrb[0].mxu0
    %701 = vdwg.mxu0
    %702 = vmatprep.subr.bf16.mxu0 %v619
    %703 = vmatpush1.bf16.msra.mxu0 %v618
    %704 = vmatprep.subr.bf16.mxu0 %v623
    %705 = vmatpush1.bf16.msra.mxu0 %v622
    %706 = vmatprep.subr.bf16.mxu0 %v627
    %707 = vmatpush1.bf16.msra.mxu0 %v626
    %708 = vmatprep.subr.bf16.mxu0 %v631
    %709 = vmatpush1.bf16.msra.mxu0 %v630
    %710 = vmatprep.subr.bf16.mxu0 %v635
    %711 = vmatpush1.bf16.msra.mxu0 %v634
    %712 = vmatprep.subr.bf16.mxu0 %v639
    %713 = vmatpush1.bf16.msra.mxu0 %v638
    %714 = vmatprep.subr.bf16.mxu0 %v643
    %715 = vmatpush1.bf16.msra.mxu0 %v642
    %716 = vmatprep.subr.bf16.mxu0 %v647
    %717 = vmatpush1.bf16.msra.mxu0 %v646
    %718 = vmatprep.subr.bf16.mxu0 %v651
    %719 = vmatpush1.bf16.msra.mxu0 %v650
    %720 = vmatprep.subr.bf16.mxu0 0
    %721 = vmatpush1.bf16.msra.mxu0 0
    %722 = vmatprep.subr.bf16.mxu0 0
    %723 = vmatpush1.bf16.msra.mxu0 0
    %724 = vmatprep.subr.bf16.mxu0 0
    %725 = vmatpush1.bf16.msra.mxu0 0
    %726 = vmatprep.subr.bf16.mxu0 0
    %727 = vmatpush1.bf16.msra.mxu0 0
    %728 = vmatprep.subr.bf16.mxu0 0
    %729 = vmatpush1.bf16.msra.mxu0 0
    %730 = vmatprep.subr.bf16.mxu0 0
    %731 = vmatpush1.bf16.msra.mxu0 0
    %732 = vmatprep.subr.bf16.mxu0 0
    %733 = vmatpush1.bf16.msra.mxu0 0
    %734 = vmatprep.mubr.bf16.mxu0 %v659
    %735 = vmatmul.mubr.bf16.gmra.mrb[0].mxu0 %v655
    %v736 = vpop.f32.mrb[0].mxu0
    %v737 = vadd.f32 0.0, %v736
    %v738 = vpop.f32.mrb[0].mxu0
    %v739 = vadd.f32 0.0, %v738
    %v740 = vpop.f32.mrb[0].mxu0
    %v741 = vpop.f32.mrb[0].mxu0
    %742 = vdwg.mxu0
    %v743 = vadd.f32 %v696, %v698
    %v744 = vadd.f32 %v743, %v737
    %v745 = vadd.f32 %v744, %v739
    %746 = vadd.xlane.f32.xlu0 %v745
    %v747 = vpop.xlane.xlu0 %746
    %v748 = vmul.f32 %v747, 0.001953125
    %v749 = vmul.f32 %v696, %v696
    %v750 = vmul.f32 %v698, %v698
    %v751 = vmul.f32 %v737, %v737
    %v752 = vmul.f32 %v739, %v739
    %v753 = vadd.f32 %v749, %v750
    %v754 = vadd.f32 %v753, %v751
    %v755 = vadd.f32 %v754, %v752
    %756 = vadd.xlane.f32.xlu0 %v755
    %v757 = vpop.xlane.xlu0 %756
    %v758 = vmul.f32 %v757, 0.001953125
    %v759 = vmul.f32 %v748, %v748
    %v760 = vsub.f32 %v758, %v759
    %v761 = vmax.f32 %v760, 0.0
    %v762 = vld [vmem:[%s3] sm:$0xff]
    %v763 = vadd.f32 %v761, 1e-05
    %v764 = vrsqrt.pop %v763
    %v765 = vmul.f32 %v762, %v764
    %v766 = vld [vmem:[%s4] sm:$0xff]
    %v767 = vmul.f32 %v748, %v765
    %v768 = vsub.f32 %v766, %v767
    %770 = vset.pattern.permute.xlu0 0
    %771 = vperm.xlu0 %770, %v765
    %v772 = vpop.permute.xlu0 %771
    %v774 = vmul.f32 %v696, %v772
    %v775 = vmul.f32 %v698, %v772
    %v776 = vmul.f32 %v737, %v772
    %v777 = vmul.f32 %v739, %v772
    %779 = vset.pattern.permute.xlu0 0
    %780 = vperm.xlu0 %779, %v768
    %v781 = vpop.permute.xlu0 %780
    %v783 = vadd.f32 %v774, %v781
    %v784 = vadd.f32 %v775, %v781
    %v785 = vadd.f32 %v776, %v781
    %v786 = vadd.f32 %v777, %v781
    %v787 = vmax.f32 %v783, 0.0
    %v788 = vmax.f32 %v784, 0.0
    %v789 = vmax.f32 %v785, 0.0
    %v790 = vmax.f32 %v786, 0.0
    %v791 = vpack.c.bf16 %v787, %v787
    %v792 = vpack.c.bf16 %v788, %v788
    %v793 = vpack.c.bf16 %v789, %v789
    %v794 = vpack.c.bf16 %v790, %v790
    %796 = vrot.lane.b32.xlu0 %v794, 17
    %v797 = vpop.permute.xlu0 %796
    %801 = vrot.lane.b32.xlu0 %v791, 17
    %v802 = vpop.permute.xlu0 %801
    %803 = vrot.lane.b32.xlu0 %v792, 17
    %v804 = vpop.permute.xlu0 %803
    %805 = vrot.lane.b32.xlu0 %v793, 17
    %v806 = vpop.permute.xlu0 %805
    %v807 = vsel %vm77, %v802, %v804
    %v808 = vsel %vm77, %v804, %v806
    %v809 = vsel %vm77, %v806, %v797
    %v815 = vsel %vm84, %v797, %v802
    %v817 = vmul.bf16 %v815, %v105
    %v818 = vmul.bf16 %v807, %v112
    %v819 = vmul.bf16 %v808, %v119
    %v820 = vmul.bf16 %v809, %v126
    %821 = vst [vmem:[#allocation2] sm:$0xf] %v817
    %822 = vst [vmem:[#allocation2 + $0x8] sm:$0xf] %v818
    %823 = vst [vmem:[#allocation2 + $0x10] sm:$0xf] %v819
    %824 = vst [vmem:[#allocation2 + $0x18] sm:$0xf] %v820
    %825 = vrot.lane.b32.xlu0 %v794, 16
    %v826 = vpop.permute.xlu0 %825
    %827 = vrot.lane.b32.xlu0 %v791, 16
    %v828 = vpop.permute.xlu0 %827
    %829 = vrot.lane.b32.xlu0 %v792, 16
    %v830 = vpop.permute.xlu0 %829
    %831 = vrot.lane.b32.xlu0 %v793, 16
    %v832 = vpop.permute.xlu0 %831
    %v833 = vsel %vm147, %v828, %v830
    %v834 = vsel %vm147, %v830, %v832
    %v835 = vsel %vm147, %v832, %v826
    %v841 = vsel %vm154, %v826, %v828
    %v843 = vmul.bf16 %v841, %v165
    %v844 = vmul.bf16 %v833, %v172
    %v845 = vmul.bf16 %v834, %v179
    %v846 = vmul.bf16 %v835, %v186
    %847 = vst [vmem:[#allocation2 + $0x20] sm:$0xf] %v843
    %848 = vst [vmem:[#allocation2 + $0x28] sm:$0xf] %v844
    %849 = vst [vmem:[#allocation2 + $0x30] sm:$0xf] %v845
    %850 = vst [vmem:[#allocation2 + $0x38] sm:$0xf] %v846
    %851 = vrot.lane.b32.xlu0 %v794, 15
    %v852 = vpop.permute.xlu0 %851
    %853 = vrot.lane.b32.xlu0 %v791, 15
    %v854 = vpop.permute.xlu0 %853
    %855 = vrot.lane.b32.xlu0 %v792, 15
    %v856 = vpop.permute.xlu0 %855
    %857 = vrot.lane.b32.xlu0 %v793, 15
    %v858 = vpop.permute.xlu0 %857
    %v859 = vsel %vm207, %v854, %v856
    %v860 = vsel %vm207, %v856, %v858
    %v861 = vsel %vm207, %v858, %v852
    %v867 = vsel %vm214, %v852, %v854
    %v869 = vmul.bf16 %v867, %v235
    %v870 = vmul.bf16 %v859, %v242
    %v871 = vmul.bf16 %v860, %v249
    %v872 = vmul.bf16 %v861, %v256
    %873 = vst [vmem:[#allocation2 + $0x40] sm:$0xf] %v869
    %874 = vst [vmem:[#allocation2 + $0x48] sm:$0xf] %v870
    %875 = vst [vmem:[#allocation2 + $0x50] sm:$0xf] %v871
    %876 = vst [vmem:[#allocation2 + $0x58] sm:$0xf] %v872
    %877 = vrot.lane.b32.xlu0 %v794, 1
    %v878 = vpop.permute.xlu0 %877
    %879 = vrot.lane.b32.xlu0 %v791, 1
    %v880 = vpop.permute.xlu0 %879
    %881 = vrot.lane.b32.xlu0 %v792, 1
    %v882 = vpop.permute.xlu0 %881
    %883 = vrot.lane.b32.xlu0 %v793, 1
    %v884 = vpop.permute.xlu0 %883
    %v885 = vsel %vm277, %v880, %v882
    %v886 = vsel %vm277, %v882, %v884
    %v887 = vsel %vm277, %v884, %v878
    %v893 = vsel %vm284, %v878, %v880
    %v895 = vmul.bf16 %v893, %v295
    %v896 = vmul.bf16 %v885, %v302
    %v897 = vmul.bf16 %v886, %v309
    %v898 = vmul.bf16 %v887, %v316
    %899 = vst [vmem:[#allocation2 + $0x60] sm:$0xf] %v895
    %900 = vst [vmem:[#allocation2 + $0x68] sm:$0xf] %v896
    %901 = vst [vmem:[#allocation2 + $0x70] sm:$0xf] %v897
    %902 = vst [vmem:[#allocation2 + $0x78] sm:$0xf] %v898
    %903 = vst [vmem:[#allocation2 + $0x80] sm:$0xf] %v791
    %904 = vst [vmem:[#allocation2 + $0x88] sm:$0xf] %v792
    %905 = vst [vmem:[#allocation2 + $0x90] sm:$0xf] %v793
    %906 = vst [vmem:[#allocation2 + $0x98] sm:$0xf] %v794
    %907 = vrot.lane.b32.xlu0 %v791, 127
    %v908 = vpop.permute.xlu0 %907
    %909 = vrot.lane.b32.xlu0 %v792, 127
    %v910 = vpop.permute.xlu0 %909
    %911 = vrot.lane.b32.xlu0 %v793, 127
    %v912 = vpop.permute.xlu0 %911
    %913 = vrot.lane.b32.xlu0 %v794, 127
    %v914 = vpop.permute.xlu0 %913
    %v915 = vsel %vm349, %v908, %v910
    %v916 = vsel %vm349, %v910, %v912
    %v917 = vsel %vm349, %v912, %v914
    %v923 = vsel %vm356, %v914, %v908
    %v925 = vmul.bf16 %v915, %v378
    %v926 = vmul.bf16 %v916, %v386
    %v927 = vmul.bf16 %v917, %v394
    %v928 = vmul.bf16 %v923, %v402
    %929 = vst [vmem:[#allocation2 + $0xa0] sm:$0xf] %v925
    %930 = vst [vmem:[#allocation2 + $0xa8] sm:$0xf] %v926
    %931 = vst [vmem:[#allocation2 + $0xb0] sm:$0xf] %v927
    %932 = vst [vmem:[#allocation2 + $0xb8] sm:$0xf] %v928
    %933 = vrot.lane.b32.xlu0 %v791, 113
    %v934 = vpop.permute.xlu0 %933
    %935 = vrot.lane.b32.xlu0 %v792, 113
    %v936 = vpop.permute.xlu0 %935
    %937 = vrot.lane.b32.xlu0 %v793, 113
    %v938 = vpop.permute.xlu0 %937
    %939 = vrot.lane.b32.xlu0 %v794, 113
    %v940 = vpop.permute.xlu0 %939
    %v941 = vsel %vm423, %v934, %v936
    %v942 = vsel %vm423, %v936, %v938
    %v943 = vsel %vm423, %v938, %v940
    %v949 = vsel %vm430, %v940, %v934
    %v951 = vmul.bf16 %v941, %v451
    %v952 = vmul.bf16 %v942, %v458
    %v953 = vmul.bf16 %v943, %v465
    %v954 = vmul.bf16 %v949, %v472
    %955 = vst [vmem:[#allocation2 + $0xc0] sm:$0xf] %v951
    %956 = vst [vmem:[#allocation2 + $0xc8] sm:$0xf] %v952
    %957 = vst [vmem:[#allocation2 + $0xd0] sm:$0xf] %v953
    %958 = vst [vmem:[#allocation2 + $0xd8] sm:$0xf] %v954
    %959 = vrot.lane.b32.xlu0 %v791, 112
    %v960 = vpop.permute.xlu0 %959
    %961 = vrot.lane.b32.xlu0 %v792, 112
    %v962 = vpop.permute.xlu0 %961
    %963 = vrot.lane.b32.xlu0 %v793, 112
    %v964 = vpop.permute.xlu0 %963
    %965 = vrot.lane.b32.xlu0 %v794, 112
    %v966 = vpop.permute.xlu0 %965
    %v967 = vsel %vm493, %v960, %v962
    %v968 = vsel %vm493, %v962, %v964
    %v969 = vsel %vm493, %v964, %v966
    %v975 = vsel %vm500, %v966, %v960
    %v977 = vmul.bf16 %v967, %v511
    %v978 = vmul.bf16 %v968, %v518
    %v979 = vmul.bf16 %v969, %v525
    %v980 = vmul.bf16 %v975, %v532
    %981 = vst [vmem:[#allocation2 + $0xe0] sm:$0xf] %v977
    %982 = vst [vmem:[#allocation2 + $0xe8] sm:$0xf] %v978
    %983 = vst [vmem:[#allocation2 + $0xf0] sm:$0xf] %v979
    %984 = vst [vmem:[#allocation2 + $0xf8] sm:$0xf] %v980
    %985 = vrot.lane.b32.xlu0 %v791, 111
    %v986 = vpop.permute.xlu0 %985
    %987 = vrot.lane.b32.xlu0 %v792, 111
    %v988 = vpop.permute.xlu0 %987
    %989 = vrot.lane.b32.xlu0 %v793, 111
    %v990 = vpop.permute.xlu0 %989
    %991 = vrot.lane.b32.xlu0 %v794, 111
    %v992 = vpop.permute.xlu0 %991
    %v993 = vsel %vm553, %v986, %v988
    %v994 = vsel %vm553, %v988, %v990
    %v995 = vsel %vm553, %v990, %v992
    %v1001 = vsel %vm560, %v992, %v986
    %v1003 = vmul.bf16 %v993, %v581
    %v1004 = vmul.bf16 %v994, %v588
    %v1005 = vmul.bf16 %v995, %v595
    %v1006 = vmul.bf16 %v1001, %v602
    %1007 = vst [vmem:[#allocation2 + $0x100] sm:$0xf] %v1003
    %1008 = vst [vmem:[#allocation2 + $0x108] sm:$0xf] %v1004
    %1009 = vst [vmem:[#allocation2 + $0x110] sm:$0xf] %v1005
    %1010 = vst [vmem:[#allocation2 + $0x118] sm:$0xf] %v1006
    %v1011 = vld [vmem:[%s5] sm:$0xff]
    %v1012 = vld [vmem:[#allocation2] sm:$0xff]
    %v1013 = vld [vmem:[#allocation2 + $0x8] sm:$0xff]
    %v1014 = vld [vmem:[#allocation2 + $0x10] sm:$0xff]
    %v1015 = vld [vmem:[#allocation2 + $0x18] sm:$0xff]
    %v1016 = vld [vmem:[#allocation2 + $0x20] sm:$0xff]
    %v1017 = vld [vmem:[#allocation2 + $0x28] sm:$0xff]
    %v1018 = vld [vmem:[#allocation2 + $0x30] sm:$0xff]
    %v1019 = vld [vmem:[#allocation2 + $0x38] sm:$0xff]
    %v1020 = vld [vmem:[#allocation2 + $0x40] sm:$0xff]
    %v1021 = vld [vmem:[#allocation2 + $0x48] sm:$0xff]
    %v1022 = vld [vmem:[#allocation2 + $0x50] sm:$0xff]
    %v1023 = vld [vmem:[#allocation2 + $0x58] sm:$0xff]
    %v1024 = vld [vmem:[#allocation2 + $0x60] sm:$0xff]
    %v1025 = vld [vmem:[#allocation2 + $0x68] sm:$0xff]
    %v1026 = vld [vmem:[#allocation2 + $0x70] sm:$0xff]
    %v1027 = vld [vmem:[#allocation2 + $0x78] sm:$0xff]
    %v1028 = vld [vmem:[#allocation2 + $0x80] sm:$0xff]
    %v1029 = vld [vmem:[#allocation2 + $0x88] sm:$0xff]
    %v1030 = vld [vmem:[#allocation2 + $0x90] sm:$0xff]
    %v1031 = vld [vmem:[#allocation2 + $0x98] sm:$0xff]
    %v1032 = vld [vmem:[#allocation2 + $0xa0] sm:$0xff]
    %v1033 = vld [vmem:[#allocation2 + $0xa8] sm:$0xff]
    %v1034 = vld [vmem:[#allocation2 + $0xb0] sm:$0xff]
    %v1035 = vld [vmem:[#allocation2 + $0xb8] sm:$0xff]
    %v1036 = vld [vmem:[#allocation2 + $0xc0] sm:$0xff]
    %v1037 = vld [vmem:[#allocation2 + $0xc8] sm:$0xff]
    %v1038 = vld [vmem:[#allocation2 + $0xd0] sm:$0xff]
    %v1039 = vld [vmem:[#allocation2 + $0xd8] sm:$0xff]
    %v1040 = vld [vmem:[#allocation2 + $0xe0] sm:$0xff]
    %v1041 = vld [vmem:[#allocation2 + $0xe8] sm:$0xff]
    %v1042 = vld [vmem:[#allocation2 + $0xf0] sm:$0xff]
    %v1043 = vld [vmem:[#allocation2 + $0xf8] sm:$0xff]
    %v1044 = vld [vmem:[#allocation2 + $0x100] sm:$0xff]
    %v1045 = vld [vmem:[#allocation2 + $0x108] sm:$0xff]
    %v1046 = vld [vmem:[#allocation2 + $0x110] sm:$0xff]
    %v1047 = vld [vmem:[#allocation2 + $0x118] sm:$0xff]
    %v1049 = vunpack.c.l.b16 %v1011
    %v1050 = vunpack.c.h.b16 %v1011
    %v1051 = vpack.c.b16 %v1049, %v1049
    %v1052 = vpack.c.b16 %v1050, %v1050
    %v1055 = vsel %vm154, %v1052, 0
    %1057 = vmatprep.subr.bf16.mxu0 %v1013
    %1058 = vmatpush1.bf16.msra.mxu0 %v1012
    %1059 = vmatprep.subr.bf16.mxu0 %v1017
    %1060 = vmatpush1.bf16.msra.mxu0 %v1016
    %1061 = vmatprep.subr.bf16.mxu0 %v1021
    %1062 = vmatpush1.bf16.msra.mxu0 %v1020
    %1063 = vmatprep.subr.bf16.mxu0 %v1025
    %1064 = vmatpush1.bf16.msra.mxu0 %v1024
    %1065 = vmatprep.subr.bf16.mxu0 %v1029
    %1066 = vmatpush1.bf16.msra.mxu0 %v1028
    %1067 = vmatprep.subr.bf16.mxu0 %v1033
    %1068 = vmatpush1.bf16.msra.mxu0 %v1032
    %1069 = vmatprep.subr.bf16.mxu0 %v1037
    %1070 = vmatpush1.bf16.msra.mxu0 %v1036
    %1071 = vmatprep.subr.bf16.mxu0 %v1041
    %1072 = vmatpush1.bf16.msra.mxu0 %v1040
    %1073 = vmatprep.subr.bf16.mxu0 %v1045
    %1074 = vmatpush1.bf16.msra.mxu0 %v1044
    %1075 = vmatprep.subr.bf16.mxu0 0
    %1076 = vmatpush1.bf16.msra.mxu0 0
    %1077 = vmatprep.subr.bf16.mxu0 0
    %1078 = vmatpush1.bf16.msra.mxu0 0
    %1079 = vmatprep.subr.bf16.mxu0 0
    %1080 = vmatpush1.bf16.msra.mxu0 0
    %1081 = vmatprep.subr.bf16.mxu0 0
    %1082 = vmatpush1.bf16.msra.mxu0 0
    %1083 = vmatprep.subr.bf16.mxu0 0
    %1084 = vmatpush1.bf16.msra.mxu0 0
    %1085 = vmatprep.subr.bf16.mxu0 0
    %1086 = vmatpush1.bf16.msra.mxu0 0
    %1087 = vmatprep.subr.bf16.mxu0 0
    %1088 = vmatpush1.bf16.msra.mxu0 0
    %1089 = vmatprep.mubr.bf16.mxu0 %v1055
    %1090 = vmatmul.mubr.bf16.gmra.mrb[0].mxu0 %v1051
    %v1091 = vpop.f32.mrb[0].mxu0
    %v1092 = vadd.f32 0.0, %v1091
    %v1093 = vpop.f32.mrb[0].mxu0
    %v1094 = vadd.f32 0.0, %v1093
    %v1095 = vpop.f32.mrb[0].mxu0
    %v1096 = vpop.f32.mrb[0].mxu0
    %1097 = vdwg.mxu0
    %1098 = vmatprep.subr.bf16.mxu0 %v1015
    %1099 = vmatpush1.bf16.msra.mxu0 %v1014
    %1100 = vmatprep.subr.bf16.mxu0 %v1019
    %1101 = vmatpush1.bf16.msra.mxu0 %v1018
    %1102 = vmatprep.subr.bf16.mxu0 %v1023
    %1103 = vmatpush1.bf16.msra.mxu0 %v1022
    %1104 = vmatprep.subr.bf16.mxu0 %v1027
    %1105 = vmatpush1.bf16.msra.mxu0 %v1026
    %1106 = vmatprep.subr.bf16.mxu0 %v1031
    %1107 = vmatpush1.bf16.msra.mxu0 %v1030
    %1108 = vmatprep.subr.bf16.mxu0 %v1035
    %1109 = vmatpush1.bf16.msra.mxu0 %v1034
    %1110 = vmatprep.subr.bf16.mxu0 %v1039
    %1111 = vmatpush1.bf16.msra.mxu0 %v1038
    %1112 = vmatprep.subr.bf16.mxu0 %v1043
    %1113 = vmatpush1.bf16.msra.mxu0 %v1042
    %1114 = vmatprep.subr.bf16.mxu0 %v1047
    %1115 = vmatpush1.bf16.msra.mxu0 %v1046
    %1116 = vmatprep.subr.bf16.mxu0 0
    %1117 = vmatpush1.bf16.msra.mxu0 0
    %1118 = vmatprep.subr.bf16.mxu0 0
    %1119 = vmatpush1.bf16.msra.mxu0 0
    %1120 = vmatprep.subr.bf16.mxu0 0
    %1121 = vmatpush1.bf16.msra.mxu0 0
    %1122 = vmatprep.subr.bf16.mxu0 0
    %1123 = vmatpush1.bf16.msra.mxu0 0
    %1124 = vmatprep.subr.bf16.mxu0 0
    %1125 = vmatpush1.bf16.msra.mxu0 0
    %1126 = vmatprep.subr.bf16.mxu0 0
    %1127 = vmatpush1.bf16.msra.mxu0 0
    %1128 = vmatprep.subr.bf16.mxu0 0
    %1129 = vmatpush1.bf16.msra.mxu0 0
    %1130 = vmatprep.mubr.bf16.mxu0 %v1055
    %1131 = vmatmul.mubr.bf16.gmra.mrb[0].mxu0 %v1051
    %v1132 = vpop.f32.mrb[0].mxu0
    %v1133 = vadd.f32 0.0, %v1132
    %v1134 = vpop.f32.mrb[0].mxu0
    %v1135 = vadd.f32 0.0, %v1134
    %v1136 = vpop.f32.mrb[0].mxu0
    %v1137 = vpop.f32.mrb[0].mxu0
    %1138 = vdwg.mxu0
    %v1139 = vadd.f32 %v1092, %v1094
    %v1140 = vadd.f32 %v1139, %v1133
    %v1141 = vadd.f32 %v1140, %v1135
    %1142 = vadd.xlane.f32.xlu0 %v1141
    %v1143 = vpop.xlane.xlu0 %1142
    %v1144 = vmul.f32 %v1143, 0.001953125
    %v1145 = vmul.f32 %v1092, %v1092
    %v1146 = vmul.f32 %v1094, %v1094
    %v1147 = vmul.f32 %v1133, %v1133
    %v1148 = vmul.f32 %v1135, %v1135
    %v1149 = vadd.f32 %v1145, %v1146
    %v1150 = vadd.f32 %v1149, %v1147
    %v1151 = vadd.f32 %v1150, %v1148
    %1152 = vadd.xlane.f32.xlu0 %v1151
    %v1153 = vpop.xlane.xlu0 %1152
    %v1154 = vmul.f32 %v1153, 0.001953125
    %v1155 = vmul.f32 %v1144, %v1144
    %v1156 = vsub.f32 %v1154, %v1155
    %v1157 = vmax.f32 %v1156, 0.0
    %v1158 = vld [vmem:[%s6] sm:$0xff]
    %v1159 = vadd.f32 %v1157, 1e-05
    %v1160 = vrsqrt.pop %v1159
    %v1161 = vmul.f32 %v1158, %v1160
    %v1162 = vld [vmem:[%s7] sm:$0xff]
    %v1163 = vmul.f32 %v1144, %v1161
    %v1164 = vsub.f32 %v1162, %v1163
    %1166 = vset.pattern.permute.xlu0 0
    %1167 = vperm.xlu0 %1166, %v1161
    %v1168 = vpop.permute.xlu0 %1167
    %v1170 = vmul.f32 %v1092, %v1168
    %v1171 = vmul.f32 %v1094, %v1168
    %v1172 = vmul.f32 %v1133, %v1168
    %v1173 = vmul.f32 %v1135, %v1168
    %1175 = vset.pattern.permute.xlu0 0
    %1176 = vperm.xlu0 %1175, %v1164
    %v1177 = vpop.permute.xlu0 %1176
    %v1179 = vadd.f32 %v1170, %v1177
    %v1180 = vadd.f32 %v1171, %v1177
    %v1181 = vadd.f32 %v1172, %v1177
    %v1182 = vadd.f32 %v1173, %v1177
    %v1183 = vld [vmem:[%s8] sm:$0xf]
    %v1184 = vpack.c.bf16 %v1179, %v1179
    %v1185 = vpack.c.bf16 %v1180, %v1180
    %v1186 = vpack.c.bf16 %v1181, %v1181
    %v1187 = vpack.c.bf16 %v1182, %v1182
    %vm1188 = vcmask 64512
    %v1190 = vsel %vm1188, %v1183, 0
    %vm1192 = vcmask 1043456
    %v1194 = vsel %vm1192, %v1184, 0
    %v1197 = vsel %vm1192, %v1185, 0
    %v1200 = vsel %vm1192, %v1186, 0
    %v1203 = vsel %vm1192, %v1187, 0
    %1205 = vmatprep.subr.bf16.mxu0 %v1197
    %1206 = vmatpush1.bf16.msra.mxu0 %v1194
    %1207 = vmatprep.subr.bf16.mxu0 0
    %1208 = vmatpush1.bf16.msra.mxu0 0
    %1209 = vmatprep.subr.bf16.mxu0 0
    %1210 = vmatpush1.bf16.msra.mxu0 0
    %1211 = vmatprep.subr.bf16.mxu0 0
    %1212 = vmatpush1.bf16.msra.mxu0 0
    %1213 = vmatprep.subr.bf16.mxu0 0
    %1214 = vmatpush1.bf16.msra.mxu0 0
    %1215 = vmatprep.subr.bf16.mxu0 0
    %1216 = vmatpush1.bf16.msra.mxu0 0
    %1217 = vmatprep.subr.bf16.mxu0 0
    %1218 = vmatpush1.bf16.msra.mxu0 0
    %1219 = vmatprep.subr.bf16.mxu0 0
    %1220 = vmatpush1.bf16.msra.mxu0 0
    %1221 = vmatprep.subr.bf16.mxu0 0
    %1222 = vmatpush1.bf16.msra.mxu0 0
    %1223 = vmatprep.subr.bf16.mxu0 0
    %1224 = vmatpush1.bf16.msra.mxu0 0
    %1225 = vmatprep.subr.bf16.mxu0 0
    %1226 = vmatpush1.bf16.msra.mxu0 0
    %1227 = vmatprep.subr.bf16.mxu0 0
    %1228 = vmatpush1.bf16.msra.mxu0 0
    %1229 = vmatprep.subr.bf16.mxu0 0
    %1230 = vmatpush1.bf16.msra.mxu0 0
    %1231 = vmatprep.subr.bf16.mxu0 0
    %1232 = vmatpush1.bf16.msra.mxu0 0
    %1233 = vmatprep.subr.bf16.mxu0 0
    %1234 = vmatpush1.bf16.msra.mxu0 0
    %1235 = vmatprep.subr.bf16.mxu0 0
    %1236 = vmatpush1.bf16.msra.mxu0 0
    %1237 = vmatprep.mubr.bf16.mxu0 0
    %1238 = vmatmul.mubr.bf16.gmra.mrb[0].mxu0 %v1190
    %v1239 = vpop.f32.mrb[0].mxu0
    %v1240 = vadd.f32 0.0, %v1239
    %v1241 = vpop.f32.mrb[0].mxu0
    %v1242 = vadd.f32 0.0, %v1241
    %v1243 = vpop.f32.mrb[0].mxu0
    %v1244 = vpop.f32.mrb[0].mxu0
    %1245 = vdwg.mxu0
    %1246 = vmatprep.subr.bf16.mxu0 %v1203
    %1247 = vmatpush1.bf16.msra.mxu0 %v1200
    %1248 = vmatprep.subr.bf16.mxu0 0
    %1249 = vmatpush1.bf16.msra.mxu0 0
    %1250 = vmatprep.subr.bf16.mxu0 0
    %1251 = vmatpush1.bf16.msra.mxu0 0
    %1252 = vmatprep.subr.bf16.mxu0 0
    %1253 = vmatpush1.bf16.msra.mxu0 0
    %1254 = vmatprep.subr.bf16.mxu0 0
    %1255 = vmatpush1.bf16.msra.mxu0 0
    %1256 = vmatprep.subr.bf16.mxu0 0
    %1257 = vmatpush1.bf16.msra.mxu0 0
    %1258 = vmatprep.subr.bf16.mxu0 0
    %1259 = vmatpush1.bf16.msra.mxu0 0
    %1260 = vmatprep.subr.bf16.mxu0 0
    %1261 = vmatpush1.bf16.msra.mxu0 0
    %1262 = vmatprep.subr.bf16.mxu0 0
    %1263 = vmatpush1.bf16.msra.mxu0 0
    %1264 = vmatprep.subr.bf16.mxu0 0
    %1265 = vmatpush1.bf16.msra.mxu0 0
    %1266 = vmatprep.subr.bf16.mxu0 0
    %1267 = vmatpush1.bf16.msra.mxu0 0
    %1268 = vmatprep.subr.bf16.mxu0 0
    %1269 = vmatpush1.bf16.msra.mxu0 0
    %1270 = vmatprep.subr.bf16.mxu0 0
    %1271 = vmatpush1.bf16.msra.mxu0 0
    %1272 = vmatprep.subr.bf16.mxu0 0
    %1273 = vmatpush1.bf16.msra.mxu0 0
    %1274 = vmatprep.subr.bf16.mxu0 0
    %1275 = vmatpush1.bf16.msra.mxu0 0
    %1276 = vmatprep.subr.bf16.mxu0 0
    %1277 = vmatpush1.bf16.msra.mxu0 0
    %1278 = vmatprep.mubr.bf16.mxu0 0
    %1279 = vmatmul.mubr.bf16.gmra.mrb[0].mxu0 %v1190
    %v1280 = vpop.f32.mrb[0].mxu0
    %v1281 = vadd.f32 0.0, %v1280
    %v1282 = vpop.f32.mrb[0].mxu0
    %v1283 = vadd.f32 0.0, %v1282
    %v1284 = vpop.f32.mrb[0].mxu0
    %v1285 = vpop.f32.mrb[0].mxu0
    %1286 = vdwg.mxu0
    %v1287 = vadd.f32 %v1240, %v1242
    %v1288 = vadd.f32 %v1287, %v1281
    %v1289 = vadd.f32 %v1288, %v1283
    %1290 = vadd.xlane.f32.xlu0 %v1289
    %v1291 = vpop.xlane.xlu0 %1290
    %v1292 = vmul.f32 %v1291, 0.001953125
    %v1293 = vmul.f32 %v1240, %v1240
    %v1294 = vmul.f32 %v1242, %v1242
    %v1295 = vmul.f32 %v1281, %v1281
    %v1296 = vmul.f32 %v1283, %v1283
    %v1297 = vadd.f32 %v1293, %v1294
    %v1298 = vadd.f32 %v1297, %v1295
    %v1299 = vadd.f32 %v1298, %v1296
    %1300 = vadd.xlane.f32.xlu0 %v1299
    %v1301 = vpop.xlane.xlu0 %1300
    %v1302 = vmul.f32 %v1301, 0.001953125
    %v1303 = vmul.f32 %v1292, %v1292
    %v1304 = vsub.f32 %v1302, %v1303
    %v1305 = vmax.f32 %v1304, 0.0
    %v1306 = vld [vmem:[%s9] sm:$0xff]
    %v1307 = vadd.f32 %v1305, 1e-05
    %v1308 = vrsqrt.pop %v1307
    %v1309 = vmul.f32 %v1306, %v1308
    %v1310 = vld [vmem:[%s10] sm:$0xff]
    %v1311 = vmul.f32 %v1292, %v1309
    %v1312 = vsub.f32 %v1310, %v1311
    %1314 = vset.pattern.permute.xlu0 0
    %1315 = vperm.xlu0 %1314, %v1309
    %v1316 = vpop.permute.xlu0 %1315
    %v1318 = vmul.f32 %v1240, %v1316
    %v1319 = vmul.f32 %v1242, %v1316
    %v1320 = vmul.f32 %v1281, %v1316
    %v1321 = vmul.f32 %v1283, %v1316
    %1323 = vset.pattern.permute.xlu0 0
    %1324 = vperm.xlu0 %1323, %v1312
    %v1325 = vpop.permute.xlu0 %1324
    %v1327 = vadd.f32 %v1318, %v1325
    %v1328 = vadd.f32 %v1319, %v1325
    %v1329 = vadd.f32 %v1320, %v1325
    %v1330 = vadd.f32 %v1321, %v1325
    %v1331 = vadd.f32 %v1179, %v1327
    %v1332 = vadd.f32 %v1180, %v1328
    %v1333 = vadd.f32 %v1181, %v1329
    %v1334 = vadd.f32 %v1182, %v1330
    %v1335 = vmax.f32 %v1331, 0.0
    %v1336 = vmax.f32 %v1332, 0.0
    %v1337 = vmax.f32 %v1333, 0.0
    %v1338 = vmax.f32 %v1334, 0.0
    %1339 = vst [vmem:[#allocation3] sm:$0xff] %v1335
    %1340 = vst [vmem:[#allocation3 + $0x8] sm:$0xff] %v1336
    %1341 = vst [vmem:[#allocation3 + $0x10] sm:$0xff] %v1337
    %1342 = vst [vmem:[#allocation3 + $0x18] sm:$0xff] %v1338
    // Predicated region
    $region46: #{tpu_custom_call.1} parent=1 // pred_check
      _
    $region47: #{tpu_custom_call.1} parent=1 // pred_check_branch
      %1344 = sbr.rel (0) target = $region49
    $region48: #{tpu_custom_call.1} parent=1 // pred_region
      %s1346 = ssub.s32 512, 512
      %1347 = vsyncadd [#allocation4], %s1346
      %s1349 = sshll.u32 [#allocation3], 4
      %s1350 = int_to_ptr.vmem [resolvable:$true] %s1349
      %1352 = dma.vmem_to_hbm [thread:$0]  %s1350, 512, %s11, [#allocation4]
    $region49: #{tpu_custom_call.1} parent=1 // pred_fallthru
      _
    // Predicated region
    $region50: #{tpu_custom_call.1} parent=1 // pred_check
      _
    $region51: #{tpu_custom_call.1} parent=1 // pred_check_branch
      %1354 = sbr.rel (0) target = $region53
    $region52: #{tpu_custom_call.1} parent=1 // pred_region
      %1355 = dma.done [#allocation4], 512
    $region53: #{tpu_custom_call.1} parent=1 // pred_fallthru
      _
    %1356 = vsyncpa [#allocation4], 1

</llo_original>
